<compile_context>
chip_gen: v5e
topology: v5e:2x2
jax: 0.10.0
libtpu: 0.0.40
codegen_flags: <defaults>
</compile_context>

<pallas_src>
import jax
import jax.numpy as jnp
import numpy as np
from jax.experimental import pallas as pl
from jax.experimental.pallas import tpu as pltpu

LANE = 128


def _round_up(n, m):
    return ((n + m - 1) // m) * m


def _vmem_limit_bytes():
    """Generation-aware scoped-VMEM limit with a safe fallback."""
    try:
        info = pltpu.get_tpu_info()
        cap = int(getattr(info, "vmem_capacity_bytes"))
        # ~48 MiB on 64 MiB v7x, capped near ~96-100 MiB on 128 MiB v5e/v6e.
        return min(cap * 3 // 4, 100 * 1024 * 1024)
    except Exception:
        return 32 * 1024 * 1024


# --------------------------------------------------------------------------- #
# Kernel
# --------------------------------------------------------------------------- #
def _make_kernel(with_gate):
    def kernel(x_ref, w1_ref, w2_ref, fc2w_ref, fc2b_ref, cfw_ref, cfb_ref,
               *out_refs):
        out_ref = out_refs[0]                     # (TB, Cp) logits
        mm_dt = w1_ref.dtype                      # bf16 or f32 matmul operands

        # Streamed tile is cast in-kernel (no host-side cast pass over x).
        x_mm = x_ref[...].astype(mm_dt)           # (TB, Dp)

        # ---- SELayer: y = sigmoid(relu(x @ W1) @ W2) -----------------------
        h = jnp.dot(x_mm, w1_ref[...], preferred_element_type=jnp.float32)
        h = jnp.maximum(h, 0.0)
        z = jnp.dot(h.astype(mm_dt), w2_ref[...],
                    preferred_element_type=jnp.float32)
        ez = jnp.exp(-z)                          # EUP
        if with_gate:
            # y is an exported output -> exact sigmoid.
            y = 1.0 / (1.0 + ez)
        else:
            # Internal only: reciprocal rides the EUP slot (off the VALU).
            y = pl.reciprocal(1.0 + ez, approx=True)

        # Gate multiply in the MXU dtype (bf16 VPU path on v6e/v7x); feeds
        # fc2 directly — avoids two (TB, Dp) f32 cast passes and a temporary.
        xs = x_mm * y.astype(mm_dt)

        # ---- bn1 + fc2 + bn2 folded into one matmul; relu; dropouts are
        #      identities in eval mode. -------------------------------------
        h2 = jnp.dot(xs, fc2w_ref[...], preferred_element_type=jnp.float32)
        h2 = jnp.maximum(h2 + fc2b_ref[...], 0.0)

        # ---- classifier (lane-padded to Cp; padded cols are exact zeros) ---
        logits = jnp.dot(h2.astype(mm_dt), cfw_ref[...],
                         preferred_element_type=jnp.float32)
        out_ref[...] = (logits + cfb_ref[...]).astype(out_ref.dtype)

        if with_gate:
            out_refs[1][...] = y.astype(out_refs[1].dtype)

    return kernel


# --------------------------------------------------------------------------- #
# Host-side parameter preparation (folding / padding / casting)
# --------------------------------------------------------------------------- #
def prepare_params(p, *, use_bf16=True, eps=1e-5):
    """Fold BN into fc2, zero-pad lane-sparse dims to 128, cast MXU operands."""
    D, hid = p["w1"].shape
    F2 = p["fc2_w"].shape[1]            # 128
    C = p["cf_w"].shape[1]

    Dp = _round_up(D, LANE)
    Hp = _round_up(hid, LANE)
    F2p = _round_up(F2, LANE)
    Cp = _round_up(C, LANE)

    # Eval-mode BatchNorm as affine scale/shift.
    s1 = p["bn1_gamma"] / jnp.sqrt(p["bn1_var"] + eps)
    b1 = p["bn1_beta"] - p["bn1_mean"] * s1
    s2 = p["bn2_gamma"] / jnp.sqrt(p["bn2_var"] + eps)
    b2 = p["bn2_beta"] - p["bn2_mean"] * s2

    # Fold bn1 (pre-matmul affine) and bn2 (post-matmul affine) into fc2.
    fc2_w = (s1[:, None] * p["fc2_w"]) * s2[None, :]
    fc2_b = (b1 @ p["fc2_w"]) * s2 + b2

    mm_dtype = jnp.bfloat16 if use_bf16 else jnp.float32

    def pad2(a, rows, cols):
        return jnp.zeros((rows, cols), jnp.float32).at[:a.shape[0], :a.shape[1]].set(a)

    return {
        "w1": pad2(p["w1"], Dp, Hp).astype(mm_dtype),
        "w2": pad2(p["w2"], Hp, Dp).astype(mm_dtype),
        "fc2_w": pad2(fc2_w, Dp, F2p).astype(mm_dtype),
        "fc2_b": pad2(fc2_b[None, :], 1, F2p),            # f32
        "cf_w": pad2(p["cf_w"], F2p, Cp).astype(mm_dtype),
        "cf_b": pad2(p["cf_b"][None, :], 1, Cp),          # f32, padded cols zero
        "inp_dim": D,
        "ncls": C,
    }


# --------------------------------------------------------------------------- #
# pallas_call wrapper
# --------------------------------------------------------------------------- #
def unimlp_senet_forward(x, prepared, *, block_b=512, return_gate=True,
                         gate_dtype=jnp.bfloat16, logits_dtype=jnp.float32):
    """x: (B, inp_dim) f32. Returns (logits (B, ncls), gate (B, inp_dim))."""
    B, D = x.shape
    assert D == prepared["inp_dim"]
    C = prepared["ncls"]
    Dp, Hp = prepared["w1"].shape
    F2p = prepared["fc2_w"].shape[1]
    Cp = prepared["cf_w"].shape[1]

    # Lane-pad x only when inp_dim is not a multiple of 128.  The batch dim is
    # never padded and no host-side cast is done: the kernel casts tiles and
    # the cdiv grid masks the ragged edge tile (rows past B are never written;
    # the math is row-independent so edge-tile garbage rows are harmless).
    x_in = x if D == Dp else jnp.zeros((B, Dp), x.dtype).at[:, :D].set(x)

    sub = 16                                    # safe for f32 and packed bf16
    vmem_limit = _vmem_limit_bytes()

    # Batch tile: as big as the budget allows (mem-bound kernel), but always
    # >= 2 grid tiles when the batch can be split (v7x megacore balance).
    TB = _round_up(min(block_b, max(B, 1)), sub)
    if pl.cdiv(B, TB) == 1 and TB >= 2 * sub:
        TB = _round_up(pl.cdiv(B, 2), sub)

    # Crude live-set guard: streamed x + outputs (double-buffered) plus ~6
    # (TB, Dp)-class f32 intermediates plus weights must fit the VMEM budget.
    x_b = int(np.dtype(x_in.dtype).itemsize)
    gate_b = int(np.dtype(gate_dtype).itemsize) if return_gate else 0
    log_b = int(np.dtype(logits_dtype).itemsize)
    w_bytes = 2 * sum(int(prepared[k].size) * int(prepared[k].dtype.itemsize)
                      for k in ("w1", "w2", "fc2_w", "fc2_b", "cf_w", "cf_b"))

    def _tile_bytes(tb):
        per_row = Dp * (2 * x_b + 2 * gate_b + 6 * 4) + Cp * 2 * log_b
        return tb * per_row + w_bytes

    while TB > sub and _tile_bytes(TB) > int(0.7 * vmem_limit):
        TB = _round_up(TB // 2, sub)
    # TODO(synk): for very large inp_dim a K-tiled inner loop (emit_pipeline /
    #             extra grid axis with an accumulator) would be needed instead
    #             of just shrinking TB.

    grid = (pl.cdiv(B, TB),)
    args = (x_in, prepared["w1"], prepared["w2"], prepared["fc2_w"],
            prepared["fc2_b"], prepared["cf_w"], prepared["cf_b"])

    out_shape = [jax.ShapeDtypeStruct((B, Cp), logits_dtype)]
    out_specs = [pl.BlockSpec((TB, Cp), lambda i: (i, 0))]
    if return_gate:
        out_shape.append(jax.ShapeDtypeStruct((B, Dp), gate_dtype))
        out_specs.append(pl.BlockSpec((TB, Dp), lambda i: (i, 0)))

    def _build(single_buffer_weights):
        def resident(a):
            shp = a.shape
            idx = lambda i: (0,) * len(shp)
            if single_buffer_weights:
                # Constant block index -> one VMEM buffer is enough.
                return pl.BlockSpec(shp, idx, pipeline_mode=pl.Buffered(1))
            return pl.BlockSpec(shp, idx)

        in_specs = [pl.BlockSpec((TB, Dp), lambda i: (i, 0))] + \
                   [resident(a) for a in args[1:]]

        return pl.pallas_call(
            _make_kernel(return_gate),
            out_shape=tuple(out_shape),
            grid=grid,
            in_specs=in_specs,
            out_specs=tuple(out_specs),
            compiler_params=pltpu.CompilerParams(
                dimension_semantics=("parallel",),   # shards across v7x's 2 TCs
                vmem_limit_bytes=vmem_limit,
            ),
        )

    try:
        outs = _build(True)(*args)          # single-buffered resident weights
    except Exception:                        # older JAX without Buffered(1)
        outs = _build(False)(*args)

    # Only lane-dim slices remain (batch is exact); skipped entirely when the
    # logical dims are already 128-aligned.
    logits = outs[0] if C == Cp else outs[0][:, :C]
    if not return_gate:
        return logits
    gate = outs[1] if D == Dp else outs[1][:, :D]
    return logits, gate


# --------------------------------------------------------------------------- #
# Raw (module-style) parameters and pure-JAX reference
# --------------------------------------------------------------------------- #
def init_params(key, inp_dim, ncls, reduction=16):
    """Raw params mirroring the PyTorch module (Linear weights pre-transposed)."""
    hid = max(1, inp_dim // reduction)
    ks = jax.random.split(key, 13)
    n = jax.random.normal
    return {
        "w1": 0.1 * n(ks[0], (inp_dim, hid), jnp.float32),
        "w2": 0.1 * n(ks[1], (hid, inp_dim), jnp.float32),
        "fc2_w": 0.05 * n(ks[2], (inp_dim, 128), jnp.float32),
        "cf_w": 0.05 * n(ks[3], (128, ncls), jnp.float32),
        "cf_b": 0.01 * n(ks[4], (ncls,), jnp.float32),
        "bn1_gamma": 1.0 + 0.05 * n(ks[5], (inp_dim,), jnp.float32),
        "bn1_beta": 0.05 * n(ks[6], (inp_dim,), jnp.float32),
        "bn1_mean": 0.1 * n(ks[7], (inp_dim,), jnp.float32),
        "bn1_var": 0.5 + jax.random.uniform(ks[8], (inp_dim,), jnp.float32),
        "bn2_gamma": 1.0 + 0.05 * n(ks[9], (128,), jnp.float32),
        "bn2_beta": 0.05 * n(ks[10], (128,), jnp.float32),
        "bn2_mean": 0.1 * n(ks[11], (128,), jnp.float32),
        "bn2_var": 0.5 + jax.random.uniform(ks[12], (128,), jnp.float32),
    }


def reference_forward(x, p, eps=1e-5):
    """Pure-JAX f32 eval-mode forward (module semantics)."""
    h = jnp.maximum(x @ p["w1"], 0.0)
    y = jax.nn.sigmoid(h @ p["w2"])
    xs = x * y
    s1 = p["bn1_gamma"] / jnp.sqrt(p["bn1_var"] + eps)
    xb = (xs - p["bn1_mean"]) * s1 + p["bn1_beta"]
    s2 = p["bn2_gamma"] / jnp.sqrt(p["bn2_var"] + eps)
    h2 = jnp.maximum((xb @ p["fc2_w"] - p["bn2_mean"]) * s2 + p["bn2_beta"], 0.0)
    logits = h2 @ p["cf_w"] + p["cf_b"]
    return logits, y


if __name__ == "__main__":
    key = jax.random.PRNGKey(0)
    k_x, k_p, k_x2, k_p2 = jax.random.split(key, 4)

    # ---- Config A: inp_dim needs lane padding (64 -> 128) ------------------
    B, D, C = 64, 64, 10
    x = jax.random.normal(k_x, (B, D), jnp.float32)
    raw = init_params(k_p, D, C)
    ref_logits, ref_y = reference_forward(x, raw)

    # f32 matmul path, f32 gate: tight check of the kernel math (BN folding,
    # lane padding, cdiv batch grid, exact sigmoid for the exported gate).
    p32 = prepare_params(raw, use_bf16=False)
    l32, y32 = unimlp_senet_forward(x, p32, block_b=32, gate_dtype=jnp.float32)
    jax.block_until_ready((l32, y32))
    assert l32.shape == (B, C) and y32.shape == (B, D)
    assert jnp.allclose(l32, ref_logits, atol=2e-3, rtol=2e-3), "f32 logits mismatch"
    assert jnp.allclose(y32, ref_y, atol=2e-3, rtol=2e-3), "f32 gate mismatch"

    # bf16 MXU operands + bf16 gate output (default fast path).
    p16 = prepare_params(raw, use_bf16=True)
    l16, y16 = unimlp_senet_forward(x, p16)
    jax.block_until_ready((l16, y16))
    assert l16.shape == (B, C) and y16.shape == (B, D)
    assert jnp.allclose(l16, ref_logits, atol=3e-2, rtol=3e-2), "bf16 logits mismatch"
    assert jnp.allclose(y16.astype(jnp.float32), ref_y, atol=2e-2, rtol=2e-2), \
        "bf16 gate mismatch"

    # ---- Config B: inp_dim already 128-aligned (x streamed with no host pad)
    #      and a ragged batch (B=50) exercising the masked edge tile. --------
    B2, D2, C2 = 50, 128, 10
    x2 = jax.random.normal(k_x2, (B2, D2), jnp.float32)
    raw2 = init_params(k_p2, D2, C2)
    ref_l2, ref_y2 = reference_forward(x2, raw2)
    p2 = prepare_params(raw2, use_bf16=True)
    l2, y2 = unimlp_senet_forward(x2, p2)
    jax.block_until_ready((l2, y2))
    assert l2.shape == (B2, C2) and y2.shape == (B2, D2)
    assert jnp.allclose(l2, ref_l2, atol=3e-2, rtol=3e-2), "cfgB logits mismatch"
    assert jnp.allclose(y2.astype(jnp.float32), ref_y2, atol=2e-2, rtol=2e-2), \
        "cfgB gate mismatch"

    # Logits-only path (no gate stream, approx-EUP sigmoid internally).
    l_only = unimlp_senet_forward(x2, p2, return_gate=False)
    jax.block_until_ready(l_only)
    assert l_only.shape == (B2, C2)
    assert jnp.allclose(l_only, ref_l2, atol=3e-2, rtol=3e-2), "no-gate logits mismatch"

    print("KERNEL_OK")
</pallas_src>

<mosaic_0001>
module attributes {stable_mosaic.version = 11 : i64} {
  func.func @kernel(%arg0: i32, %arg1: memref<32x128xf32, #tpu.memory_space<vmem>>, %arg2: memref<128x128xf32, #tpu.memory_space<vmem>>, %arg3: memref<128x128xf32, #tpu.memory_space<vmem>>, %arg4: memref<128x128xf32, #tpu.memory_space<vmem>>, %arg5: memref<1x128xf32, #tpu.memory_space<vmem>>, %arg6: memref<128x128xf32, #tpu.memory_space<vmem>>, %arg7: memref<1x128xf32, #tpu.memory_space<vmem>>, %arg8: memref<32x128xf32, #tpu.memory_space<vmem>>, %arg9: memref<32x128xf32, #tpu.memory_space<vmem>>) attributes {dimension_semantics = [#tpu.dimension_semantics<parallel>], iteration_bounds = array<i64: 2>, scalar_prefetch = 0 : i64, scratch_operands = 0 : i64, tpu.core_type = #tpu.core_type<tc>, window_params = [{transform_indices = @transform_0, window_bounds = array<i64: 32, 128>}, {pipeline_mode = #tpu.pipeline_mode<synchronous>, transform_indices = @transform_1, window_bounds = array<i64: 128, 128>}, {pipeline_mode = #tpu.pipeline_mode<synchronous>, transform_indices = @transform_2, window_bounds = array<i64: 128, 128>}, {pipeline_mode = #tpu.pipeline_mode<synchronous>, transform_indices = @transform_3, window_bounds = array<i64: 128, 128>}, {pipeline_mode = #tpu.pipeline_mode<synchronous>, transform_indices = @transform_4, window_bounds = array<i64: 1, 128>}, {pipeline_mode = #tpu.pipeline_mode<synchronous>, transform_indices = @transform_5, window_bounds = array<i64: 128, 128>}, {pipeline_mode = #tpu.pipeline_mode<synchronous>, transform_indices = @transform_6, window_bounds = array<i64: 1, 128>}, {transform_indices = @transform_7, window_bounds = array<i64: 32, 128>}, {transform_indices = @transform_8, window_bounds = array<i64: 32, 128>}]} {
    %c0 = arith.constant 0 : index
    %c0_0 = arith.constant 0 : index
    %0 = vector.load %arg1[%c0, %c0_0] : memref<32x128xf32, #tpu.memory_space<vmem>>, vector<32x128xf32>
    %c0_1 = arith.constant 0 : index
    %c0_2 = arith.constant 0 : index
    %1 = vector.load %arg2[%c0_1, %c0_2] : memref<128x128xf32, #tpu.memory_space<vmem>>, vector<128x128xf32>
    %cst = arith.constant dense<0.000000e+00> : vector<32x128xf32>
    %2 = tpu.matmul %0, %1, %cst {dimension_numbers = #tpu.dot_dimension_numbers<[1], [0], [0], [1], [0, 0, 1, 1], [], []>} : vector<32x128xf32>, vector<128x128xf32>, vector<32x128xf32> -> vector<32x128xf32>
    %cst_3 = arith.constant 0.000000e+00 : f32
    %3 = vector.broadcast %cst_3 : f32 to vector<32x128xf32>
    %4 = arith.maximumf %2, %3 : vector<32x128xf32>
    %c0_4 = arith.constant 0 : index
    %c0_5 = arith.constant 0 : index
    %5 = vector.load %arg3[%c0_4, %c0_5] : memref<128x128xf32, #tpu.memory_space<vmem>>, vector<128x128xf32>
    %cst_6 = arith.constant dense<0.000000e+00> : vector<32x128xf32>
    %6 = tpu.matmul %4, %5, %cst_6 {dimension_numbers = #tpu.dot_dimension_numbers<[1], [0], [0], [1], [0, 0, 1, 1], [], []>} : vector<32x128xf32>, vector<128x128xf32>, vector<32x128xf32> -> vector<32x128xf32>
    %cst_7 = arith.constant 0.000000e+00 : f32
    %7 = vector.broadcast %cst_7 : f32 to vector<32x128xf32>
    %8 = arith.subf %7, %6 : vector<32x128xf32>
    %9 = math.exp %8 : vector<32x128xf32>
    %cst_8 = arith.constant 1.000000e+00 : f32
    %10 = vector.broadcast %cst_8 : f32 to vector<32x128xf32>
    %11 = arith.addf %10, %9 : vector<32x128xf32>
    %cst_9 = arith.constant 1.000000e+00 : f32
    %12 = vector.broadcast %cst_9 : f32 to vector<32x128xf32>
    %13 = arith.divf %12, %11 : vector<32x128xf32>
    %14 = arith.mulf %0, %13 : vector<32x128xf32>
    %c0_10 = arith.constant 0 : index
    %c0_11 = arith.constant 0 : index
    %15 = vector.load %arg4[%c0_10, %c0_11] : memref<128x128xf32, #tpu.memory_space<vmem>>, vector<128x128xf32>
    %cst_12 = arith.constant dense<0.000000e+00> : vector<32x128xf32>
    %16 = tpu.matmul %14, %15, %cst_12 {dimension_numbers = #tpu.dot_dimension_numbers<[1], [0], [0], [1], [0, 0, 1, 1], [], []>} : vector<32x128xf32>, vector<128x128xf32>, vector<32x128xf32> -> vector<32x128xf32>
    %c0_13 = arith.constant 0 : index
    %c0_14 = arith.constant 0 : index
    %17 = vector.load %arg5[%c0_13, %c0_14] : memref<1x128xf32, #tpu.memory_space<vmem>>, vector<1x128xf32>
    %18 = vector.broadcast %17 : vector<1x128xf32> to vector<32x128xf32>
    %19 = arith.addf %16, %18 : vector<32x128xf32>
    %cst_15 = arith.constant 0.000000e+00 : f32
    %20 = vector.broadcast %cst_15 : f32 to vector<32x128xf32>
    %21 = arith.maximumf %19, %20 : vector<32x128xf32>
    %c0_16 = arith.constant 0 : index
    %c0_17 = arith.constant 0 : index
    %22 = vector.load %arg6[%c0_16, %c0_17] : memref<128x128xf32, #tpu.memory_space<vmem>>, vector<128x128xf32>
    %cst_18 = arith.constant dense<0.000000e+00> : vector<32x128xf32>
    %23 = tpu.matmul %21, %22, %cst_18 {dimension_numbers = #tpu.dot_dimension_numbers<[1], [0], [0], [1], [0, 0, 1, 1], [], []>} : vector<32x128xf32>, vector<128x128xf32>, vector<32x128xf32> -> vector<32x128xf32>
    %c0_19 = arith.constant 0 : index
    %c0_20 = arith.constant 0 : index
    %24 = vector.load %arg7[%c0_19, %c0_20] : memref<1x128xf32, #tpu.memory_space<vmem>>, vector<1x128xf32>
    %25 = vector.broadcast %24 : vector<1x128xf32> to vector<32x128xf32>
    %26 = arith.addf %23, %25 : vector<32x128xf32>
    %c0_21 = arith.constant 0 : index
    %c0_22 = arith.constant 0 : index
    %27 = vector.load %arg8[%c0_21, %c0_22] : memref<32x128xf32, #tpu.memory_space<vmem>>, vector<32x128xf32>
    tpu.vector_store %arg8[%c0_21, %c0_22], %26 {strides = array<i32>} : memref<32x128xf32, #tpu.memory_space<vmem>>, vector<32x128xf32>,
    %c0_23 = arith.constant 0 : index
    %c0_24 = arith.constant 0 : index
    %28 = vector.load %arg9[%c0_23, %c0_24] : memref<32x128xf32, #tpu.memory_space<vmem>>, vector<32x128xf32>
    tpu.vector_store %arg9[%c0_23, %c0_24], %13 {strides = array<i32>} : memref<32x128xf32, #tpu.memory_space<vmem>>, vector<32x128xf32>,
    return
  }
  func.func @transform_0(%arg0: i32) -> (i32, i32) {
    %c0_i32 = arith.constant 0 : i32
    %c0_i32_0 = arith.constant 0 : i32
    return %arg0, %c0_i32 : i32, i32
  }
  func.func @transform_1(%arg0: i32) -> (i32, i32) {
    %c0_i32 = arith.constant 0 : i32
    %c0_i32_0 = arith.constant 0 : i32
    %c0_i32_1 = arith.constant 0 : i32
    return %c0_i32, %c0_i32_0 : i32, i32
  }
  func.func @transform_2(%arg0: i32) -> (i32, i32) {
    %c0_i32 = arith.constant 0 : i32
    %c0_i32_0 = arith.constant 0 : i32
    %c0_i32_1 = arith.constant 0 : i32
    return %c0_i32, %c0_i32_0 : i32, i32
  }
  func.func @transform_3(%arg0: i32) -> (i32, i32) {
    %c0_i32 = arith.constant 0 : i32
    %c0_i32_0 = arith.constant 0 : i32
    %c0_i32_1 = arith.constant 0 : i32
    return %c0_i32, %c0_i32_0 : i32, i32
  }
  func.func @transform_4(%arg0: i32) -> (i32, i32) {
    %c0_i32 = arith.constant 0 : i32
    %c0_i32_0 = arith.constant 0 : i32
    %c0_i32_1 = arith.constant 0 : i32
    return %c0_i32, %c0_i32_0 : i32, i32
  }
  func.func @transform_5(%arg0: i32) -> (i32, i32) {
    %c0_i32 = arith.constant 0 : i32
    %c0_i32_0 = arith.constant 0 : i32
    %c0_i32_1 = arith.constant 0 : i32
    return %c0_i32, %c0_i32_0 : i32, i32
  }
  func.func @transform_6(%arg0: i32) -> (i32, i32) {
    %c0_i32 = arith.constant 0 : i32
    %c0_i32_0 = arith.constant 0 : i32
    %c0_i32_1 = arith.constant 0 : i32
    return %c0_i32, %c0_i32_0 : i32, i32
  }
  func.func @transform_7(%arg0: i32) -> (i32, i32) {
    %c0_i32 = arith.constant 0 : i32
    %c0_i32_0 = arith.constant 0 : i32
    return %arg0, %c0_i32 : i32, i32
  }
  func.func @transform_8(%arg0: i32) -> (i32, i32) {
    %c0_i32 = arith.constant 0 : i32
    %c0_i32_0 = arith.constant 0 : i32
    return %arg0, %c0_i32 : i32, i32
  }
}

module attributes {stable_mosaic.version = 11 : i64} {
  func.func @kernel(%arg0: i32, %arg1: memref<32x128xf32, #tpu.memory_space<vmem>>, %arg2: memref<128x128xf32, #tpu.memory_space<vmem>>, %arg3: memref<128x128xf32, #tpu.memory_space<vmem>>, %arg4: memref<128x128xf32, #tpu.memory_space<vmem>>, %arg5: memref<1x128xf32, #tpu.memory_space<vmem>>, %arg6: memref<128x128xf32, #tpu.memory_space<vmem>>, %arg7: memref<1x128xf32, #tpu.memory_space<vmem>>, %arg8: memref<32x128xf32, #tpu.memory_space<vmem>>, %arg9: memref<32x128xf32, #tpu.memory_space<vmem>>) attributes {dimension_semantics = [#tpu.dimension_semantics<parallel>], iteration_bounds = array<i64: 2>, scalar_prefetch = 0 : i64, scratch_operands = 0 : i64, tpu.core_type = #tpu.core_type<tc>, window_params = [{transform_indices = @transform_0, window_bounds = array<i64: 32, 128>}, {pipeline_mode = #tpu.pipeline_mode<synchronous>, transform_indices = @transform_1, window_bounds = array<i64: 128, 128>}, {pipeline_mode = #tpu.pipeline_mode<synchronous>, transform_indices = @transform_2, window_bounds = array<i64: 128, 128>}, {pipeline_mode = #tpu.pipeline_mode<synchronous>, transform_indices = @transform_3, window_bounds = array<i64: 128, 128>}, {pipeline_mode = #tpu.pipeline_mode<synchronous>, transform_indices = @transform_4, window_bounds = array<i64: 1, 128>}, {pipeline_mode = #tpu.pipeline_mode<synchronous>, transform_indices = @transform_5, window_bounds = array<i64: 128, 128>}, {pipeline_mode = #tpu.pipeline_mode<synchronous>, transform_indices = @transform_6, window_bounds = array<i64: 1, 128>}, {transform_indices = @transform_7, window_bounds = array<i64: 32, 128>}, {transform_indices = @transform_8, window_bounds = array<i64: 32, 128>}]} {
    %c0 = arith.constant 0 : index
    %c0_0 = arith.constant 0 : index
    %0 = vector.load %arg1[%c0, %c0_0] : memref<32x128xf32, #tpu.memory_space<vmem>>, vector<32x128xf32>
    %c0_1 = arith.constant 0 : index
    %c0_2 = arith.constant 0 : index
    %1 = vector.load %arg2[%c0_1, %c0_2] : memref<128x128xf32, #tpu.memory_space<vmem>>, vector<128x128xf32>
    %cst = arith.constant dense<0.000000e+00> : vector<32x128xf32>
    %2 = tpu.matmul %0, %1, %cst {dimension_numbers = #tpu.dot_dimension_numbers<[1], [0], [0], [1], [0, 0, 1, 1], [], []>} : vector<32x128xf32>, vector<128x128xf32>, vector<32x128xf32> -> vector<32x128xf32>
    %cst_3 = arith.constant 0.000000e+00 : f32
    %3 = vector.broadcast %cst_3 : f32 to vector<32x128xf32>
    %4 = arith.maximumf %2, %3 : vector<32x128xf32>
    %c0_4 = arith.constant 0 : index
    %c0_5 = arith.constant 0 : index
    %5 = vector.load %arg3[%c0_4, %c0_5] : memref<128x128xf32, #tpu.memory_space<vmem>>, vector<128x128xf32>
    %cst_6 = arith.constant dense<0.000000e+00> : vector<32x128xf32>
    %6 = tpu.matmul %4, %5, %cst_6 {dimension_numbers = #tpu.dot_dimension_numbers<[1], [0], [0], [1], [0, 0, 1, 1], [], []>} : vector<32x128xf32>, vector<128x128xf32>, vector<32x128xf32> -> vector<32x128xf32>
    %cst_7 = arith.constant 0.000000e+00 : f32
    %7 = vector.broadcast %cst_7 : f32 to vector<32x128xf32>
    %8 = arith.subf %7, %6 : vector<32x128xf32>
    %9 = math.exp %8 : vector<32x128xf32>
    %cst_8 = arith.constant 1.000000e+00 : f32
    %10 = vector.broadcast %cst_8 : f32 to vector<32x128xf32>
    %11 = arith.addf %10, %9 : vector<32x128xf32>
    %cst_9 = arith.constant 1.000000e+00 : f32
    %12 = vector.broadcast %cst_9 : f32 to vector<32x128xf32>
    %13 = arith.divf %12, %11 : vector<32x128xf32>
    %14 = arith.mulf %0, %13 : vector<32x128xf32>
    %c0_10 = arith.constant 0 : index
    %c0_11 = arith.constant 0 : index
    %15 = vector.load %arg4[%c0_10, %c0_11] : memref<128x128xf32, #tpu.memory_space<vmem>>, vector<128x128xf32>
    %cst_12 = arith.constant dense<0.000000e+00> : vector<32x128xf32>
    %16 = tpu.matmul %14, %15, %cst_12 {dimension_numbers = #tpu.dot_dimension_numbers<[1], [0], [0], [1], [0, 0, 1, 1], [], []>} : vector<32x128xf32>, vector<128x128xf32>, vector<32x128xf32> -> vector<32x128xf32>
    %c0_13 = arith.constant 0 : index
    %c0_14 = arith.constant 0 : index
    %17 = vector.load %arg5[%c0_13, %c0_14] : memref<1x128xf32, #tpu.memory_space<vmem>>, vector<1x128xf32>
    %18 = vector.broadcast %17 : vector<1x128xf32> to vector<32x128xf32>
    %19 = arith.addf %16, %18 : vector<32x128xf32>
    %cst_15 = arith.constant 0.000000e+00 : f32
    %20 = vector.broadcast %cst_15 : f32 to vector<32x128xf32>
    %21 = arith.maximumf %19, %20 : vector<32x128xf32>
    %c0_16 = arith.constant 0 : index
    %c0_17 = arith.constant 0 : index
    %22 = vector.load %arg6[%c0_16, %c0_17] : memref<128x128xf32, #tpu.memory_space<vmem>>, vector<128x128xf32>
    %cst_18 = arith.constant dense<0.000000e+00> : vector<32x128xf32>
    %23 = tpu.matmul %21, %22, %cst_18 {dimension_numbers = #tpu.dot_dimension_numbers<[1], [0], [0], [1], [0, 0, 1, 1], [], []>} : vector<32x128xf32>, vector<128x128xf32>, vector<32x128xf32> -> vector<32x128xf32>
    %c0_19 = arith.constant 0 : index
    %c0_20 = arith.constant 0 : index
    %24 = vector.load %arg7[%c0_19, %c0_20] : memref<1x128xf32, #tpu.memory_space<vmem>>, vector<1x128xf32>
    %25 = vector.broadcast %24 : vector<1x128xf32> to vector<32x128xf32>
    %26 = arith.addf %23, %25 : vector<32x128xf32>
    %c0_21 = arith.constant 0 : index
    %c0_22 = arith.constant 0 : index
    %27 = vector.load %arg8[%c0_21, %c0_22] : memref<32x128xf32, #tpu.memory_space<vmem>>, vector<32x128xf32>
    tpu.vector_store %arg8[%c0_21, %c0_22], %26 {strides = array<i32>} : memref<32x128xf32, #tpu.memory_space<vmem>>, vector<32x128xf32>,
    %c0_23 = arith.constant 0 : index
    %c0_24 = arith.constant 0 : index
    %28 = vector.load %arg9[%c0_23, %c0_24] : memref<32x128xf32, #tpu.memory_space<vmem>>, vector<32x128xf32>
    tpu.vector_store %arg9[%c0_23, %c0_24], %13 {strides = array<i32>} : memref<32x128xf32, #tpu.memory_space<vmem>>, vector<32x128xf32>,
    return
  }
  func.func @transform_0(%arg0: i32) -> (i32, i32) {
    %c0_i32 = arith.constant 0 : i32
    %c0_i32_0 = arith.constant 0 : i32
    return %arg0, %c0_i32 : i32, i32
  }
  func.func @transform_1(%arg0: i32) -> (i32, i32) {
    %c0_i32 = arith.constant 0 : i32
    %c0_i32_0 = arith.constant 0 : i32
    %c0_i32_1 = arith.constant 0 : i32
    return %c0_i32, %c0_i32_0 : i32, i32
  }
  func.func @transform_2(%arg0: i32) -> (i32, i32) {
    %c0_i32 = arith.constant 0 : i32
    %c0_i32_0 = arith.constant 0 : i32
    %c0_i32_1 = arith.constant 0 : i32
    return %c0_i32, %c0_i32_0 : i32, i32
  }
  func.func @transform_3(%arg0: i32) -> (i32, i32) {
    %c0_i32 = arith.constant 0 : i32
    %c0_i32_0 = arith.constant 0 : i32
    %c0_i32_1 = arith.constant 0 : i32
    return %c0_i32, %c0_i32_0 : i32, i32
  }
  func.func @transform_4(%arg0: i32) -> (i32, i32) {
    %c0_i32 = arith.constant 0 : i32
    %c0_i32_0 = arith.constant 0 : i32
    %c0_i32_1 = arith.constant 0 : i32
    return %c0_i32, %c0_i32_0 : i32, i32
  }
  func.func @transform_5(%arg0: i32) -> (i32, i32) {
    %c0_i32 = arith.constant 0 : i32
    %c0_i32_0 = arith.constant 0 : i32
    %c0_i32_1 = arith.constant 0 : i32
    return %c0_i32, %c0_i32_0 : i32, i32
  }
  func.func @transform_6(%arg0: i32) -> (i32, i32) {
    %c0_i32 = arith.constant 0 : i32
    %c0_i32_0 = arith.constant 0 : i32
    %c0_i32_1 = arith.constant 0 : i32
    return %c0_i32, %c0_i32_0 : i32, i32
  }
  func.func @transform_7(%arg0: i32) -> (i32, i32) {
    %c0_i32 = arith.constant 0 : i32
    %c0_i32_0 = arith.constant 0 : i32
    return %arg0, %c0_i32 : i32, i32
  }
  func.func @transform_8(%arg0: i32) -> (i32, i32) {
    %c0_i32 = arith.constant 0 : i32
    %c0_i32_0 = arith.constant 0 : i32
    return %arg0, %c0_i32 : i32, i32
  }
}

</mosaic_0001>

<llo_original>
// kernel: tpu_custom_call.1
$region0: #{tpu_custom_call.1}
  #allocation0 [shape = 'u32[]', space=smem, size = 0x4, offset = 0x4, fixed_abs, tag = 'smem constant byte address 0x4 - core index']
  #allocation1 [shape = 'u32[72,128]{1,0:T(1,128)}', space=vmem, size = 0x9000, scoped, tag = 'internal scratch']
  %s0 = inlined_call_operand.hbm [shape: f32[64,128], index: 0, kind: input, shape index: {}]
  %s1 = inlined_call_operand.hbm [shape: f32[128,128], index: 1, kind: input, shape index: {}]
  %s2 = inlined_call_operand.hbm [shape: f32[128,128], index: 2, kind: input, shape index: {}]
  %s3 = inlined_call_operand.hbm [shape: f32[128,128], index: 3, kind: input, shape index: {}]
  %s4 = inlined_call_operand.vmem [shape: f32[1,128], index: 4, kind: input, shape index: {}]
  %s5 = inlined_call_operand.hbm [shape: f32[128,128], index: 5, kind: input, shape index: {}]
  %s6 = inlined_call_operand.vmem [shape: f32[1,128], index: 6, kind: input, shape index: {}]
  %s7 = inlined_call_operand.hbm [shape: f32[64,128], index: 7, kind: output, shape index: {0}]
  %s8 = inlined_call_operand.hbm [shape: f32[64,128], index: 8, kind: output, shape index: {1}]
  %9 = xla_tuple %s7, %s8
  %s10 = sld [smem:[#allocation0]]
  $region89: #{tpu_custom_call.1} parent=0
    _
  %s12 = ssub.s32 1, %s10
  %s13 = scalar_select 0, %s12, %s10
  $region1: #{tpu_custom_call.1} parent=0
    #allocation2 [shape = 'u8[32768]{0}', space=vmem, size = 0x8000, scoped, tag = 'input window, operand 0']
    #allocation3 [shape = 's32[2]{0}', space=sflag, size = 0x8, scoped, tag = 'scoped memory for tpu_custom_call.1']
    #allocation4 [shape = 's32[2]{0}', space=sflag, size = 0x8, scoped, tag = 'scoped memory for tpu_custom_call.1']
    #allocation5 [shape = 'u8[65536]{0}', space=vmem, size = 0x10000, scoped, tag = 'input window, operand 1, single buffered']
    #allocation6 [shape = 's32[1]{0}', space=sflag, size = 0x4, scoped, tag = 'scoped memory for tpu_custom_call.1']
    #allocation7 [shape = 'u8[65536]{0}', space=vmem, size = 0x10000, scoped, tag = 'input window, operand 2, single buffered']
    #allocation8 [shape = 'u8[65536]{0}', space=vmem, size = 0x10000, scoped, tag = 'input window, operand 3, single buffered']
    #allocation9 [shape = 's32[1]{0}', space=sflag, size = 0x4, scoped, tag = 'scoped memory for tpu_custom_call.1']
    #allocation10 [shape = 'u8[65536]{0}', space=vmem, size = 0x10000, scoped, tag = 'input window, operand 5, single buffered']
    #allocation11 [shape = 'u8[32768]{0}', space=vmem, size = 0x8000, scoped, tag = 'output window, operand 0']
    #allocation12 [shape = 'u8[32768]{0}', space=vmem, size = 0x8000, scoped, tag = 'output window, operand 1']
    #allocation13 [shape = 's32[2]{0}', space=sflag, size = 0x8, scoped, tag = 'scoped memory for tpu_custom_call.1']
    %14 = vsyncpa [#allocation3], 0
    %s15 = scalar_lea.sflag [#allocation3], 1
    %16 = vsyncpa %s15, 0
    %17 = vsyncpa [#allocation6], 0
    %18 = vsyncpa [#allocation9], 0
    %19 = vsyncpa [#allocation4], 0
    %s20 = scalar_lea.sflag [#allocation4], 1
    %21 = vsyncpa %s20, 0
    %22 = vsyncpa [#allocation13], 0
    %s23 = scalar_lea.sflag [#allocation13], 1
    %24 = vsyncpa %s23, 0
    loop: start=0, step=1, limit=4
    $region2: #{tpu_custom_call.1} parent=1 // loop_pre_header
      _
    $region3: #{tpu_custom_call.1} parent=1 // loop_header
      %s26 = sphi 0, %s30
      %p27 = scmp.ge.s32.totalorder %s26, 4
      %s36 = sphi 0, %s38
      %s39 = sphi 0, %s36
      %s40 = sphi 0, %s39
      %s56 = sphi 0, %s40
      %s60 = sphi 0, %s60
      %s62 = sphi 0, %s60
      %s63 = sphi 0, %s62
      %s77 = sphi 0, %s63
      %s81 = sphi 0, %s81
      %s83 = sphi 0, %s81
      %s84 = sphi 0, %s83
      %s98 = sphi 0, %s84
      %s102 = sphi 0, %s102
      %s104 = sphi 0, %s102
      %s105 = sphi 0, %s104
      %s119 = sphi 0, %s105
      %s123 = sphi 0, %s123
      %s125 = sphi 0, %s123
      %s126 = sphi 0, %s125
      %s140 = sphi 0, %s126
      %s144 = sphi 0, %s144
      %s146 = sphi 0, %s144
      %s147 = sphi 0, %s146
      %s161 = sphi 0, %s147
      %s165 = sphi 0, %s165
      %s167 = sphi 0, %s165
      %s168 = sphi 0, %s167
      %s182 = sphi 0, %s168
      %s188 = sphi 0, %s190
      %s191 = sphi 0, %s188
      %s192 = sphi 0, %s191
      %s208 = sphi 0, %s192
      %s214 = sphi 0, %s216
      %s217 = sphi 0, %s214
      %s218 = sphi 0, %s217
      %s234 = sphi 0, %s218
    $region4: #{tpu_custom_call.1} parent=1 // loop_header_branch
      %29 = sbr.rel (%p27) target = $region8
    $region5: #{tpu_custom_call.1} parent=1 // loop_body
      %s31 = ssub.s32 %s26, 1
      %s32 = ssub.s32 %s26, 2
      %s33 = sadd.s32 %s26, 1
      %s34 = ssub.s32 %s26, %s33
      %p35 = scmp.eq.s32.totalorder %s34, 0
      %s37 = sadd.s32 %s36, 1
      %s38 = scalar_select %p35, %s36, %s37
      %p41 = pneg %p35
      %p42 = scmp.eq.s32.totalorder %s26, 1
      %p43 = por %p41, %p42
      %p44 = scmp.ne.s32.totalorder %s36, %s39
      %p45 = scmp.eq.s32.totalorder %s26, 0
      %p46 = por %p44, %p45
      %p47 = scmp.ne.s32.totalorder %s36, %s39
      %p48 = scmp.eq.s32.totalorder %s31, 1
      %p49 = por %p47, %p48
      %p50 = scmp.ne.s32.totalorder %s39, %s40
      %p51 = scmp.eq.s32.totalorder %s31, 0
      %p52 = por %p50, %p51
      %p53 = scmp.ne.s32.totalorder %s39, %s40
      %p54 = scmp.eq.s32.totalorder %s32, 1
      %p55 = por %p53, %p54
      %p57 = scmp.ne.s32.totalorder %s40, %s56
      %p58 = scmp.eq.s32.totalorder %s32, 0
      %p59 = por %p57, %p58
      %s61 = sadd.s32 %s60, 1
      %p64 = scmp.eq.s32.totalorder %s26, 1
      %p65 = scmp.ne.s32.totalorder %s60, %s62
      %p66 = scmp.eq.s32.totalorder %s26, 0
      %p67 = por %p65, %p66
      %p68 = scmp.ne.s32.totalorder %s60, %s62
      %p69 = scmp.eq.s32.totalorder %s31, 1
      %p70 = por %p68, %p69
      %p71 = scmp.ne.s32.totalorder %s62, %s63
      %p72 = scmp.eq.s32.totalorder %s31, 0
      %p73 = por %p71, %p72
      %p74 = scmp.ne.s32.totalorder %s62, %s63
      %p75 = scmp.eq.s32.totalorder %s32, 1
      %p76 = por %p74, %p75
      %p78 = scmp.ne.s32.totalorder %s63, %s77
      %p79 = scmp.eq.s32.totalorder %s32, 0
      %p80 = por %p78, %p79
      %s82 = sadd.s32 %s81, 1
      %p85 = scmp.eq.s32.totalorder %s26, 1
      %p86 = scmp.ne.s32.totalorder %s81, %s83
      %p87 = scmp.eq.s32.totalorder %s26, 0
      %p88 = por %p86, %p87
      %p89 = scmp.ne.s32.totalorder %s81, %s83
      %p90 = scmp.eq.s32.totalorder %s31, 1
      %p91 = por %p89, %p90
      %p92 = scmp.ne.s32.totalorder %s83, %s84
      %p93 = scmp.eq.s32.totalorder %s31, 0
      %p94 = por %p92, %p93
      %p95 = scmp.ne.s32.totalorder %s83, %s84
      %p96 = scmp.eq.s32.totalorder %s32, 1
      %p97 = por %p95, %p96
      %p99 = scmp.ne.s32.totalorder %s84, %s98
      %p100 = scmp.eq.s32.totalorder %s32, 0
      %p101 = por %p99, %p100
      %s103 = sadd.s32 %s102, 1
      %p106 = scmp.eq.s32.totalorder %s26, 1
      %p107 = scmp.ne.s32.totalorder %s102, %s104
      %p108 = scmp.eq.s32.totalorder %s26, 0
      %p109 = por %p107, %p108
      %p110 = scmp.ne.s32.totalorder %s102, %s104
      %p111 = scmp.eq.s32.totalorder %s31, 1
      %p112 = por %p110, %p111
      %p113 = scmp.ne.s32.totalorder %s104, %s105
      %p114 = scmp.eq.s32.totalorder %s31, 0
      %p115 = por %p113, %p114
      %p116 = scmp.ne.s32.totalorder %s104, %s105
      %p117 = scmp.eq.s32.totalorder %s32, 1
      %p118 = por %p116, %p117
      %p120 = scmp.ne.s32.totalorder %s105, %s119
      %p121 = scmp.eq.s32.totalorder %s32, 0
      %p122 = por %p120, %p121
      %s124 = sadd.s32 %s123, 1
      %p127 = scmp.eq.s32.totalorder %s26, 1
      %p128 = scmp.ne.s32.totalorder %s123, %s125
      %p129 = scmp.eq.s32.totalorder %s26, 0
      %p130 = por %p128, %p129
      %p131 = scmp.ne.s32.totalorder %s123, %s125
      %p132 = scmp.eq.s32.totalorder %s31, 1
      %p133 = por %p131, %p132
      %p134 = scmp.ne.s32.totalorder %s125, %s126
      %p135 = scmp.eq.s32.totalorder %s31, 0
      %p136 = por %p134, %p135
      %p137 = scmp.ne.s32.totalorder %s125, %s126
      %p138 = scmp.eq.s32.totalorder %s32, 1
      %p139 = por %p137, %p138
      %p141 = scmp.ne.s32.totalorder %s126, %s140
      %p142 = scmp.eq.s32.totalorder %s32, 0
      %p143 = por %p141, %p142
      %s145 = sadd.s32 %s144, 1
      %p148 = scmp.eq.s32.totalorder %s26, 1
      %p149 = scmp.ne.s32.totalorder %s144, %s146
      %p150 = scmp.eq.s32.totalorder %s26, 0
      %p151 = por %p149, %p150
      %p152 = scmp.ne.s32.totalorder %s144, %s146
      %p153 = scmp.eq.s32.totalorder %s31, 1
      %p154 = por %p152, %p153
      %p155 = scmp.ne.s32.totalorder %s146, %s147
      %p156 = scmp.eq.s32.totalorder %s31, 0
      %p157 = por %p155, %p156
      %p158 = scmp.ne.s32.totalorder %s146, %s147
      %p159 = scmp.eq.s32.totalorder %s32, 1
      %p160 = por %p158, %p159
      %p162 = scmp.ne.s32.totalorder %s147, %s161
      %p163 = scmp.eq.s32.totalorder %s32, 0
      %p164 = por %p162, %p163
      %s166 = sadd.s32 %s165, 1
      %p169 = scmp.eq.s32.totalorder %s26, 1
      %p170 = scmp.ne.s32.totalorder %s165, %s167
      %p171 = scmp.eq.s32.totalorder %s26, 0
      %p172 = por %p170, %p171
      %p173 = scmp.ne.s32.totalorder %s165, %s167
      %p174 = scmp.eq.s32.totalorder %s31, 1
      %p175 = por %p173, %p174
      %p176 = scmp.ne.s32.totalorder %s167, %s168
      %p177 = scmp.eq.s32.totalorder %s31, 0
      %p178 = por %p176, %p177
      %p179 = scmp.ne.s32.totalorder %s167, %s168
      %p180 = scmp.eq.s32.totalorder %s32, 1
      %p181 = por %p179, %p180
      %p183 = scmp.ne.s32.totalorder %s168, %s182
      %p184 = scmp.eq.s32.totalorder %s32, 0
      %p185 = por %p183, %p184
      %s186 = ssub.s32 %s26, %s33
      %p187 = scmp.eq.s32.totalorder %s186, 0
      %s189 = sadd.s32 %s188, 1
      %s190 = scalar_select %p187, %s188, %s189
      %p193 = pneg %p187
      %p194 = scmp.eq.s32.totalorder %s26, 1
      %p195 = por %p193, %p194
      %p196 = scmp.ne.s32.totalorder %s188, %s191
      %p197 = scmp.eq.s32.totalorder %s26, 0
      %p198 = por %p196, %p197
      %p199 = scmp.ne.s32.totalorder %s188, %s191
      %p200 = scmp.eq.s32.totalorder %s31, 1
      %p201 = por %p199, %p200
      %p202 = scmp.ne.s32.totalorder %s191, %s192
      %p203 = scmp.eq.s32.totalorder %s31, 0
      %p204 = por %p202, %p203
      %p205 = scmp.ne.s32.totalorder %s191, %s192
      %p206 = scmp.eq.s32.totalorder %s32, 1
      %p207 = por %p205, %p206
      %p209 = scmp.ne.s32.totalorder %s192, %s208
      %p210 = scmp.eq.s32.totalorder %s32, 0
      %p211 = por %p209, %p210
      %s212 = ssub.s32 %s26, %s33
      %p213 = scmp.eq.s32.totalorder %s212, 0
      %s215 = sadd.s32 %s214, 1
      %s216 = scalar_select %p213, %s214, %s215
      %p219 = pneg %p213
      %p220 = scmp.eq.s32.totalorder %s26, 1
      %p221 = por %p219, %p220
      %p222 = scmp.ne.s32.totalorder %s214, %s217
      %p223 = scmp.eq.s32.totalorder %s26, 0
      %p224 = por %p222, %p223
      %p225 = scmp.ne.s32.totalorder %s214, %s217
      %p226 = scmp.eq.s32.totalorder %s31, 1
      %p227 = por %p225, %p226
      %p228 = scmp.ne.s32.totalorder %s217, %s218
      %p229 = scmp.eq.s32.totalorder %s31, 0
      %p230 = por %p228, %p229
      %p231 = scmp.ne.s32.totalorder %s217, %s218
      %p232 = scmp.eq.s32.totalorder %s32, 1
      %p233 = por %p231, %p232
      %p235 = scmp.ne.s32.totalorder %s218, %s234
      %p236 = scmp.eq.s32.totalorder %s32, 0
      %p237 = por %p235, %p236
      %p238 = scmp.le.s32.totalorder 1, %s26
      %p239 = scmp.lt.s32.totalorder %s26, 3
      %p240 = pnand %p238, %p239
      %p241 = pneg %p240
      // Predicated region
      $region9: #{tpu_custom_call.1} parent=5 // pred_check
        _
      $region10: #{tpu_custom_call.1} parent=5 // pred_check_branch
        %243 = sbr.rel (%p240) target = $region12
      $region11: #{tpu_custom_call.1} parent=5 // pred_region
        %s244 = ssub.s32 %s26, 1
        // Predicated region
        $region13: #{tpu_custom_call.1} parent=11 // pred_check
          %p245 = pneg %p73
        $region14: #{tpu_custom_call.1} parent=11 // pred_check_branch
          %247 = sbr.rel (%p245) target = $region16
        $region15: #{tpu_custom_call.1} parent=11 // pred_region
          %249 = vsyncadd [#allocation6], 0
          %s250 = sshll.u32 %s1, 4
          %s251 = int_to_ptr.hbm [resolvable:$true] %s250
          %s252 = sshll.u32 [#allocation5], 4
          %s253 = int_to_ptr.vmem [resolvable:$true] %s252
          %258 = dma.hbm_to_vmem [thread:$0]  %s251, 2048, %s253, [#allocation6], 128, 128, 8
        $region16: #{tpu_custom_call.1} parent=11 // pred_fallthru
          _
        // Predicated region
        $region17: #{tpu_custom_call.1} parent=11 // pred_check
          %p259 = pneg %p94
        $region18: #{tpu_custom_call.1} parent=11 // pred_check_branch
          %261 = sbr.rel (%p259) target = $region20
        $region19: #{tpu_custom_call.1} parent=11 // pred_region
          %263 = vsyncadd [#allocation6], 0
          %s264 = sshll.u32 %s2, 4
          %s265 = int_to_ptr.hbm [resolvable:$true] %s264
          %s266 = sshll.u32 [#allocation7], 4
          %s267 = int_to_ptr.vmem [resolvable:$true] %s266
          %272 = dma.hbm_to_vmem [thread:$0]  %s265, 2048, %s267, [#allocation6], 128, 128, 8
        $region20: #{tpu_custom_call.1} parent=11 // pred_fallthru
          _
        // Predicated region
        $region21: #{tpu_custom_call.1} parent=11 // pred_check
          %p273 = pneg %p115
        $region22: #{tpu_custom_call.1} parent=11 // pred_check_branch
          %275 = sbr.rel (%p273) target = $region24
        $region23: #{tpu_custom_call.1} parent=11 // pred_region
          %277 = vsyncadd [#allocation9], 0
          %s278 = sshll.u32 %s3, 4
          %s279 = int_to_ptr.hbm [resolvable:$true] %s278
          %s280 = sshll.u32 [#allocation8], 4
          %s281 = int_to_ptr.vmem [resolvable:$true] %s280
          %286 = dma.hbm_to_vmem [thread:$0]  %s279, 2048, %s281, [#allocation9], 128, 128, 8
        $region24: #{tpu_custom_call.1} parent=11 // pred_fallthru
          _
        // Predicated region
        $region25: #{tpu_custom_call.1} parent=11 // pred_check
          %p287 = pneg %p136
        $region26: #{tpu_custom_call.1} parent=11 // pred_check_branch
          %289 = sbr.rel (%p287) target = $region28
        $region27: #{tpu_custom_call.1} parent=11 // pred_region
          _
        $region28: #{tpu_custom_call.1} parent=11 // pred_fallthru
          _
        // Predicated region
        $region29: #{tpu_custom_call.1} parent=11 // pred_check
          %p290 = pneg %p157
        $region30: #{tpu_custom_call.1} parent=11 // pred_check_branch
          %292 = sbr.rel (%p290) target = $region32
        $region31: #{tpu_custom_call.1} parent=11 // pred_region
          %294 = vsyncadd [#allocation9], 0
          %s295 = sshll.u32 %s5, 4
          %s296 = int_to_ptr.hbm [resolvable:$true] %s295
          %s297 = sshll.u32 [#allocation10], 4
          %s298 = int_to_ptr.vmem [resolvable:$true] %s297
          %303 = dma.hbm_to_vmem [thread:$0]  %s296, 2048, %s298, [#allocation9], 128, 128, 8
        $region32: #{tpu_custom_call.1} parent=11 // pred_fallthru
          _
        // Predicated region
        $region33: #{tpu_custom_call.1} parent=11 // pred_check
          %p304 = pneg %p178
        $region34: #{tpu_custom_call.1} parent=11 // pred_check_branch
          %306 = sbr.rel (%p304) target = $region36
        $region35: #{tpu_custom_call.1} parent=11 // pred_region
          _
        $region36: #{tpu_custom_call.1} parent=11 // pred_fallthru
          _
      $region12: #{tpu_custom_call.1} parent=5 // pred_fallthru
        _
      %p307 = scmp.lt.s32.totalorder %s26, 2
      // Predicated region
      $region37: #{tpu_custom_call.1} parent=5 // pred_check
        %p308 = pneg %p307
      $region38: #{tpu_custom_call.1} parent=5 // pred_check_branch
        %310 = sbr.rel (%p308) target = $region40
      $region39: #{tpu_custom_call.1} parent=5 // pred_region
        // Predicated region
        $region41: #{tpu_custom_call.1} parent=39 // pred_check
          %p311 = pneg %p46
        $region42: #{tpu_custom_call.1} parent=39 // pred_check_branch
          %313 = sbr.rel (%p311) target = $region44
        $region43: #{tpu_custom_call.1} parent=39 // pred_region
          %s314 = sand.u32 %s36, 1
          %s315 = scalar_lea.sflag [#allocation3], %s314
          %s316 = sand.u32 %s36, 1
          %s317 = smul.addr %s316, 32
          %s318 = scalar_lea.vmem [#allocation2], %s317
          %s319 = smul.u32 4, %s26
          %321 = vsyncadd %s315, 0
          %s322 = smul.addr %s319, 8
          %s323 = scalar_lea.hbm %s0, %s322
          %s324 = sshll.u32 %s323, 4
          %s325 = int_to_ptr.hbm [resolvable:$true] %s324
          %s326 = sshll.u32 %s318, 4
          %s327 = int_to_ptr.vmem [resolvable:$true] %s326
          %332 = dma.hbm_to_vmem [thread:$0]  %s325, 512, %s327, %s315, 128, 128, 8
        $region44: #{tpu_custom_call.1} parent=39 // pred_fallthru
          _
      $region40: #{tpu_custom_call.1} parent=5 // pred_fallthru
        _
      %p333 = scmp.le.s32.totalorder 1, %s26
      %p334 = scmp.lt.s32.totalorder %s26, 3
      %p335 = pnand %p333, %p334
      %p336 = pneg %p335
      // Predicated region
      $region45: #{tpu_custom_call.1} parent=5 // pred_check
        _
      $region46: #{tpu_custom_call.1} parent=5 // pred_check_branch
        %338 = sbr.rel (%p335) target = $region48
      $region47: #{tpu_custom_call.1} parent=5 // pred_region
        %s339 = ssub.s32 %s26, 1
        %s340 = sand.u32 %s39, 1
        %s341 = scalar_lea.sflag [#allocation3], %s340
        %s342 = sand.u32 %s39, 1
        %s343 = smul.addr %s342, 32
        %s344 = scalar_lea.vmem [#allocation2], %s343
        // Predicated region
        $region49: #{tpu_custom_call.1} parent=47 // pred_check
          %p345 = pneg %p52
        $region50: #{tpu_custom_call.1} parent=47 // pred_check_branch
          %347 = sbr.rel (%p345) target = $region52
        $region51: #{tpu_custom_call.1} parent=47 // pred_region
          %349 = dma.done %s341, 512
        $region52: #{tpu_custom_call.1} parent=47 // pred_fallthru
          _
        // Predicated region
        $region53: #{tpu_custom_call.1} parent=47 // pred_check
          %p350 = pneg %p73
        $region54: #{tpu_custom_call.1} parent=47 // pred_check_branch
          %352 = sbr.rel (%p350) target = $region56
        $region55: #{tpu_custom_call.1} parent=47 // pred_region
          %354 = dma.done [#allocation6], 2048
        $region56: #{tpu_custom_call.1} parent=47 // pred_fallthru
          _
        // Predicated region
        $region57: #{tpu_custom_call.1} parent=47 // pred_check
          %p355 = pneg %p94
        $region58: #{tpu_custom_call.1} parent=47 // pred_check_branch
          %357 = sbr.rel (%p355) target = $region60
        $region59: #{tpu_custom_call.1} parent=47 // pred_region
          %359 = dma.done [#allocation6], 2048
        $region60: #{tpu_custom_call.1} parent=47 // pred_fallthru
          _
        // Predicated region
        $region61: #{tpu_custom_call.1} parent=47 // pred_check
          %p360 = pneg %p115
        $region62: #{tpu_custom_call.1} parent=47 // pred_check_branch
          %362 = sbr.rel (%p360) target = $region64
        $region63: #{tpu_custom_call.1} parent=47 // pred_region
          %364 = dma.done [#allocation9], 2048
        $region64: #{tpu_custom_call.1} parent=47 // pred_fallthru
          _
        // Predicated region
        $region65: #{tpu_custom_call.1} parent=47 // pred_check
          %p365 = pneg %p157
        $region66: #{tpu_custom_call.1} parent=47 // pred_check_branch
          %367 = sbr.rel (%p365) target = $region68
        $region67: #{tpu_custom_call.1} parent=47 // pred_region
          %369 = dma.done [#allocation9], 2048
        $region68: #{tpu_custom_call.1} parent=47 // pred_fallthru
          _
        %s370 = sand.u32 %s39, 1
        %s371 = scalar_lea.sflag [#allocation3], %s370
        %s372 = sand.u32 %s39, 1
        %s373 = smul.addr %s372, 32
        %s374 = scalar_lea.vmem [#allocation2], %s373
        %p375 = pneg %p52
        %p376 = pneg %p49
        %p377 = pneg %p73
        %p378 = pneg %p70
        %p379 = pneg %p94
        %p380 = pneg %p91
        %p381 = pneg %p115
        %p382 = pneg %p112
        %p383 = pneg %p136
        %p384 = pneg %p133
        %p385 = pneg %p157
        %p386 = pneg %p154
        %p387 = pneg %p178
        %p388 = pneg %p175
        %p389 = pneg %p204
        %p390 = pneg %p201
        %s391 = sand.u32 %s191, 1
        %s392 = scalar_lea.sflag [#allocation4], %s391
        %s393 = sand.u32 %s191, 1
        %s394 = smul.addr %s393, 32
        %s395 = scalar_lea.vmem [#allocation11], %s394
        %p396 = pneg %p230
        %p397 = pneg %p227
        %s398 = sand.u32 %s217, 1
        %s399 = scalar_lea.sflag [#allocation13], %s398
        %s400 = sand.u32 %s217, 1
        %s401 = smul.addr %s400, 32
        %s402 = scalar_lea.vmem [#allocation12], %s401
        %s403 = smul.u32 4, %s31
        %s404 = smul.u32 4, %s31
        %s405 = smul.u32 4, %s31
        %v406 = vld [vmem:[%s344] sm:$0xff]
        %v407 = vld [vmem:[%s344 + $0x8] sm:$0xff]
        %v408 = vld [vmem:[%s344 + $0x10] sm:$0xff]
        %v409 = vld [vmem:[%s344 + $0x18] sm:$0xff]
        %v410 = vld [vmem:[#allocation5] sm:$0xff]
        %v411 = vld [vmem:[#allocation5 + $0x8] sm:$0xff]
        %v412 = vld [vmem:[#allocation5 + $0x10] sm:$0xff]
        %v413 = vld [vmem:[#allocation5 + $0x18] sm:$0xff]
        %v414 = vld [vmem:[#allocation5 + $0x20] sm:$0xff]
        %v415 = vld [vmem:[#allocation5 + $0x28] sm:$0xff]
        %v416 = vld [vmem:[#allocation5 + $0x30] sm:$0xff]
        %v417 = vld [vmem:[#allocation5 + $0x38] sm:$0xff]
        %v418 = vld [vmem:[#allocation5 + $0x40] sm:$0xff]
        %v419 = vld [vmem:[#allocation5 + $0x48] sm:$0xff]
        %v420 = vld [vmem:[#allocation5 + $0x50] sm:$0xff]
        %v421 = vld [vmem:[#allocation5 + $0x58] sm:$0xff]
        %v422 = vld [vmem:[#allocation5 + $0x60] sm:$0xff]
        %v423 = vld [vmem:[#allocation5 + $0x68] sm:$0xff]
        %v424 = vld [vmem:[#allocation5 + $0x70] sm:$0xff]
        %v425 = vld [vmem:[#allocation5 + $0x78] sm:$0xff]
        %426 = vmatpush.msra.mxu0 %v425
        %427 = vmatpush.msra.mxu0 %v424
        %428 = vmatpush.msra.mxu0 %v423
        %429 = vmatpush.msra.mxu0 %v422
        %430 = vmatpush.msra.mxu0 %v421
        %431 = vmatpush.msra.mxu0 %v420
        %432 = vmatpush.msra.mxu0 %v419
        %433 = vmatpush.msra.mxu0 %v418
        %434 = vmatpush.msra.mxu0 %v417
        %435 = vmatpush.msra.mxu0 %v416
        %436 = vmatpush.msra.mxu0 %v415
        %437 = vmatpush.msra.mxu0 %v414
        %438 = vmatpush.msra.mxu0 %v413
        %439 = vmatpush.msra.mxu0 %v412
        %440 = vmatpush.msra.mxu0 %v411
        %441 = vmatpush.msra.mxu0 %v410
        %442 = vmatmul.f32.gmra.mxu0 %v406
        %v443 = vpop.f32.mrf.mxu0
        %v444 = vadd.f32 0.0, %v443
        %445 = vmatmul.f32.gmra.mxu0 %v407
        %v446 = vpop.f32.mrf.mxu0
        %v447 = vadd.f32 0.0, %v446
        %448 = vmatmul.f32.gmra.mxu0 %v408
        %v449 = vpop.f32.mrf.mxu0
        %v450 = vadd.f32 0.0, %v449
        %451 = vmatmul.f32.gmra.mxu0 %v409
        %v452 = vpop.f32.mrf.mxu0
        %v453 = vadd.f32 0.0, %v452
        %454 = vdwg.mxu0
        %v455 = vmax.f32 %v444, 0.0
        %v456 = vmax.f32 %v447, 0.0
        %v457 = vmax.f32 %v450, 0.0
        %v458 = vmax.f32 %v453, 0.0
        %v459 = vld [vmem:[#allocation7] sm:$0xff]
        %v460 = vld [vmem:[#allocation7 + $0x8] sm:$0xff]
        %v461 = vld [vmem:[#allocation7 + $0x10] sm:$0xff]
        %v462 = vld [vmem:[#allocation7 + $0x18] sm:$0xff]
        %v463 = vld [vmem:[#allocation7 + $0x20] sm:$0xff]
        %v464 = vld [vmem:[#allocation7 + $0x28] sm:$0xff]
        %v465 = vld [vmem:[#allocation7 + $0x30] sm:$0xff]
        %v466 = vld [vmem:[#allocation7 + $0x38] sm:$0xff]
        %v467 = vld [vmem:[#allocation7 + $0x40] sm:$0xff]
        %v468 = vld [vmem:[#allocation7 + $0x48] sm:$0xff]
        %v469 = vld [vmem:[#allocation7 + $0x50] sm:$0xff]
        %v470 = vld [vmem:[#allocation7 + $0x58] sm:$0xff]
        %v471 = vld [vmem:[#allocation7 + $0x60] sm:$0xff]
        %v472 = vld [vmem:[#allocation7 + $0x68] sm:$0xff]
        %v473 = vld [vmem:[#allocation7 + $0x70] sm:$0xff]
        %v474 = vld [vmem:[#allocation7 + $0x78] sm:$0xff]
        %475 = vmatpush.msra.mxu0 %v474
        %476 = vmatpush.msra.mxu0 %v473
        %477 = vmatpush.msra.mxu0 %v472
        %478 = vmatpush.msra.mxu0 %v471
        %479 = vmatpush.msra.mxu0 %v470
        %480 = vmatpush.msra.mxu0 %v469
        %481 = vmatpush.msra.mxu0 %v468
        %482 = vmatpush.msra.mxu0 %v467
        %483 = vmatpush.msra.mxu0 %v466
        %484 = vmatpush.msra.mxu0 %v465
        %485 = vmatpush.msra.mxu0 %v464
        %486 = vmatpush.msra.mxu0 %v463
        %487 = vmatpush.msra.mxu0 %v462
        %488 = vmatpush.msra.mxu0 %v461
        %489 = vmatpush.msra.mxu0 %v460
        %490 = vmatpush.msra.mxu0 %v459
        %491 = vmatmul.f32.gmra.mxu0 %v455
        %v492 = vpop.f32.mrf.mxu0
        %v493 = vadd.f32 0.0, %v492
        %494 = vmatmul.f32.gmra.mxu0 %v456
        %v495 = vpop.f32.mrf.mxu0
        %v496 = vadd.f32 0.0, %v495
        %497 = vmatmul.f32.gmra.mxu0 %v457
        %v498 = vpop.f32.mrf.mxu0
        %v499 = vadd.f32 0.0, %v498
        %500 = vmatmul.f32.gmra.mxu0 %v458
        %v501 = vpop.f32.mrf.mxu0
        %v502 = vadd.f32 0.0, %v501
        %503 = vdwg.mxu0
        %v504 = vsub.f32 0.0, %v493
        %v505 = vsub.f32 0.0, %v496
        %v506 = vsub.f32 0.0, %v499
        %v507 = vsub.f32 0.0, %v502
        %v508 = vmul.f32 %v504, 1.442695
        %v509 = vpow.pop %v508
        %v510 = vmul.f32 %v505, 1.442695
        %v511 = vpow.pop %v510
        %v512 = vmul.f32 %v506, 1.442695
        %v513 = vpow.pop %v512
        %v514 = vmul.f32 %v507, 1.442695
        %v515 = vpow.pop %v514
        %v516 = vadd.f32 %v509, 1.0
        %v517 = vadd.f32 %v511, 1.0
        %v518 = vadd.f32 %v513, 1.0
        %v519 = vadd.f32 %v515, 1.0
        %v520 = vrcp.pop %v516
        %v521 = vmul.f32 %v516, %v520
        %v522 = vsub.f32 1.0, %v521
        %v523 = vmul.f32 %v520, %v522
        %v524 = vadd.f32 %v520, %v523
        %vm525 = vweird.f32 %v516
        %vm526 = vweird.f32 %v520
        %vm527 = vmor %vm525, %vm526
        %v528 = vsel %vm527, %v520, %v524
        %v529 = vand.u32 2147483647, %v516
        %vm530 = vcmp.eq.f32.partialorder %v529, 8.507059e+37
        %v531 = vand.u32 %v516, 2147483648
        %v532 = vor.u32 1.1754944e-38, %v531
        %v533 = vsel %vm530, %v532, %v528
        %v534 = vmul.f32 1.0, %v533
        %v535 = vrcp.pop %v517
        %v536 = vmul.f32 %v517, %v535
        %v537 = vsub.f32 1.0, %v536
        %v538 = vmul.f32 %v535, %v537
        %v539 = vadd.f32 %v535, %v538
        %vm540 = vweird.f32 %v517
        %vm541 = vweird.f32 %v535
        %vm542 = vmor %vm540, %vm541
        %v543 = vsel %vm542, %v535, %v539
        %v544 = vand.u32 2147483647, %v517
        %vm545 = vcmp.eq.f32.partialorder %v544, 8.507059e+37
        %v546 = vand.u32 %v517, 2147483648
        %v547 = vor.u32 1.1754944e-38, %v546
        %v548 = vsel %vm545, %v547, %v543
        %v549 = vmul.f32 1.0, %v548
        %v550 = vrcp.pop %v518
        %v551 = vmul.f32 %v518, %v550
        %v552 = vsub.f32 1.0, %v551
        %v553 = vmul.f32 %v550, %v552
        %v554 = vadd.f32 %v550, %v553
        %vm555 = vweird.f32 %v518
        %vm556 = vweird.f32 %v550
        %vm557 = vmor %vm555, %vm556
        %v558 = vsel %vm557, %v550, %v554
        %v559 = vand.u32 2147483647, %v518
        %vm560 = vcmp.eq.f32.partialorder %v559, 8.507059e+37
        %v561 = vand.u32 %v518, 2147483648
        %v562 = vor.u32 1.1754944e-38, %v561
        %v563 = vsel %vm560, %v562, %v558
        %v564 = vmul.f32 1.0, %v563
        %v565 = vrcp.pop %v519
        %v566 = vmul.f32 %v519, %v565
        %v567 = vsub.f32 1.0, %v566
        %v568 = vmul.f32 %v565, %v567
        %v569 = vadd.f32 %v565, %v568
        %vm570 = vweird.f32 %v519
        %vm571 = vweird.f32 %v565
        %vm572 = vmor %vm570, %vm571
        %v573 = vsel %vm572, %v565, %v569
        %v574 = vand.u32 2147483647, %v519
        %vm575 = vcmp.eq.f32.partialorder %v574, 8.507059e+37
        %v576 = vand.u32 %v519, 2147483648
        %v577 = vor.u32 1.1754944e-38, %v576
        %v578 = vsel %vm575, %v577, %v573
        %v579 = vmul.f32 1.0, %v578
        %v580 = vmul.f32 %v406, %v534
        %v581 = vmul.f32 %v407, %v549
        %v582 = vmul.f32 %v408, %v564
        %v583 = vmul.f32 %v409, %v579
        %v584 = vld [vmem:[#allocation8] sm:$0xff]
        %v585 = vld [vmem:[#allocation8 + $0x8] sm:$0xff]
        %v586 = vld [vmem:[#allocation8 + $0x10] sm:$0xff]
        %v587 = vld [vmem:[#allocation8 + $0x18] sm:$0xff]
        %v588 = vld [vmem:[#allocation8 + $0x20] sm:$0xff]
        %v589 = vld [vmem:[#allocation8 + $0x28] sm:$0xff]
        %v590 = vld [vmem:[#allocation8 + $0x30] sm:$0xff]
        %v591 = vld [vmem:[#allocation8 + $0x38] sm:$0xff]
        %v592 = vld [vmem:[#allocation8 + $0x40] sm:$0xff]
        %v593 = vld [vmem:[#allocation8 + $0x48] sm:$0xff]
        %v594 = vld [vmem:[#allocation8 + $0x50] sm:$0xff]
        %v595 = vld [vmem:[#allocation8 + $0x58] sm:$0xff]
        %v596 = vld [vmem:[#allocation8 + $0x60] sm:$0xff]
        %v597 = vld [vmem:[#allocation8 + $0x68] sm:$0xff]
        %v598 = vld [vmem:[#allocation8 + $0x70] sm:$0xff]
        %v599 = vld [vmem:[#allocation8 + $0x78] sm:$0xff]
        %v600 = vld [vmem:[%s4] sm:$0x1]
        %v602 = vperm.slane %v600, 0
        %604 = vmatpush.msra.mxu0 %v599
        %605 = vmatpush.msra.mxu0 %v598
        %606 = vmatpush.msra.mxu0 %v597
        %607 = vmatpush.msra.mxu0 %v596
        %608 = vmatpush.msra.mxu0 %v595
        %609 = vmatpush.msra.mxu0 %v594
        %610 = vmatpush.msra.mxu0 %v593
        %611 = vmatpush.msra.mxu0 %v592
        %612 = vmatpush.msra.mxu0 %v591
        %613 = vmatpush.msra.mxu0 %v590
        %614 = vmatpush.msra.mxu0 %v589
        %615 = vmatpush.msra.mxu0 %v588
        %616 = vmatpush.msra.mxu0 %v587
        %617 = vmatpush.msra.mxu0 %v586
        %618 = vmatpush.msra.mxu0 %v585
        %619 = vmatpush.msra.mxu0 %v584
        %620 = vmatmul.f32.gmra.mxu0 %v580
        %v621 = vpop.f32.mrf.mxu0
        %v622 = vadd.f32 %v602, %v621
        %623 = vmatmul.f32.gmra.mxu0 %v581
        %v624 = vpop.f32.mrf.mxu0
        %v625 = vadd.f32 %v602, %v624
        %626 = vmatmul.f32.gmra.mxu0 %v582
        %v627 = vpop.f32.mrf.mxu0
        %v628 = vadd.f32 %v602, %v627
        %629 = vmatmul.f32.gmra.mxu0 %v583
        %v630 = vpop.f32.mrf.mxu0
        %v631 = vadd.f32 %v602, %v630
        %632 = vdwg.mxu0
        %v633 = vmax.f32 %v622, 0.0
        %v634 = vmax.f32 %v625, 0.0
        %v635 = vmax.f32 %v628, 0.0
        %v636 = vmax.f32 %v631, 0.0
        %v637 = vld [vmem:[#allocation10] sm:$0xff]
        %v638 = vld [vmem:[#allocation10 + $0x8] sm:$0xff]
        %v639 = vld [vmem:[#allocation10 + $0x10] sm:$0xff]
        %v640 = vld [vmem:[#allocation10 + $0x18] sm:$0xff]
        %v641 = vld [vmem:[#allocation10 + $0x20] sm:$0xff]
        %v642 = vld [vmem:[#allocation10 + $0x28] sm:$0xff]
        %v643 = vld [vmem:[#allocation10 + $0x30] sm:$0xff]
        %v644 = vld [vmem:[#allocation10 + $0x38] sm:$0xff]
        %v645 = vld [vmem:[#allocation10 + $0x40] sm:$0xff]
        %v646 = vld [vmem:[#allocation10 + $0x48] sm:$0xff]
        %v647 = vld [vmem:[#allocation10 + $0x50] sm:$0xff]
        %v648 = vld [vmem:[#allocation10 + $0x58] sm:$0xff]
        %v649 = vld [vmem:[#allocation10 + $0x60] sm:$0xff]
        %v650 = vld [vmem:[#allocation10 + $0x68] sm:$0xff]
        %v651 = vld [vmem:[#allocation10 + $0x70] sm:$0xff]
        %v652 = vld [vmem:[#allocation10 + $0x78] sm:$0xff]
        %v653 = vld [vmem:[%s6] sm:$0x1]
        %v655 = vperm.slane %v653, 0
        %657 = vmatpush.msra.mxu0 %v652
        %658 = vmatpush.msra.mxu0 %v651
        %659 = vmatpush.msra.mxu0 %v650
        %660 = vmatpush.msra.mxu0 %v649
        %661 = vmatpush.msra.mxu0 %v648
        %662 = vmatpush.msra.mxu0 %v647
        %663 = vmatpush.msra.mxu0 %v646
        %664 = vmatpush.msra.mxu0 %v645
        %665 = vmatpush.msra.mxu0 %v644
        %666 = vmatpush.msra.mxu0 %v643
        %667 = vmatpush.msra.mxu0 %v642
        %668 = vmatpush.msra.mxu0 %v641
        %669 = vmatpush.msra.mxu0 %v640
        %670 = vmatpush.msra.mxu0 %v639
        %671 = vmatpush.msra.mxu0 %v638
        %672 = vmatpush.msra.mxu0 %v637
        %673 = vmatmul.f32.gmra.mxu0 %v633
        %v674 = vpop.f32.mrf.mxu0
        %v675 = vadd.f32 %v655, %v674
        %676 = vmatmul.f32.gmra.mxu0 %v634
        %v677 = vpop.f32.mrf.mxu0
        %v678 = vadd.f32 %v655, %v677
        %679 = vmatmul.f32.gmra.mxu0 %v635
        %v680 = vpop.f32.mrf.mxu0
        %v681 = vadd.f32 %v655, %v680
        %682 = vmatmul.f32.gmra.mxu0 %v636
        %v683 = vpop.f32.mrf.mxu0
        %v684 = vadd.f32 %v655, %v683
        %685 = vdwg.mxu0
        %686 = vst [vmem:[%s395] sm:$0xff] %v675
        %687 = vst [vmem:[%s395 + $0x8] sm:$0xff] %v678
        %688 = vst [vmem:[%s395 + $0x10] sm:$0xff] %v681
        %689 = vst [vmem:[%s395 + $0x18] sm:$0xff] %v684
        %690 = vst [vmem:[%s402] sm:$0xff] %v534
        %691 = vst [vmem:[%s402 + $0x8] sm:$0xff] %v549
        %692 = vst [vmem:[%s402 + $0x10] sm:$0xff] %v564
        %693 = vst [vmem:[%s402 + $0x18] sm:$0xff] %v579
        %s694 = sand.u32 %s191, 1
        %s695 = scalar_lea.sflag [#allocation4], %s694
        %s696 = sand.u32 %s191, 1
        %s697 = smul.addr %s696, 32
        %s698 = scalar_lea.vmem [#allocation11], %s697
        %s699 = sand.u32 %s217, 1
        %s700 = scalar_lea.sflag [#allocation13], %s699
        %s701 = sand.u32 %s217, 1
        %s702 = smul.addr %s701, 32
        %s703 = scalar_lea.vmem [#allocation12], %s702
        // Predicated region
        $region69: #{tpu_custom_call.1} parent=47 // pred_check
          %p704 = pneg %p201
        $region70: #{tpu_custom_call.1} parent=47 // pred_check_branch
          %706 = sbr.rel (%p704) target = $region72
        $region71: #{tpu_custom_call.1} parent=47 // pred_region
          %s707 = smul.u32 4, %s31
          %709 = vsyncadd %s695, 0
          %s710 = smul.addr %s707, 8
          %s711 = scalar_lea.hbm %s7, %s710
          %s712 = sshll.u32 %s698, 4
          %s713 = int_to_ptr.vmem [resolvable:$true] %s712
          %s714 = sshll.u32 %s711, 4
          %s715 = int_to_ptr.hbm [resolvable:$true] %s714
          %720 = dma.vmem_to_hbm [thread:$0]  %s713, 512, %s715, %s695, 128, 128, 8
        $region72: #{tpu_custom_call.1} parent=47 // pred_fallthru
          _
        // Predicated region
        $region73: #{tpu_custom_call.1} parent=47 // pred_check
          %p721 = pneg %p227
        $region74: #{tpu_custom_call.1} parent=47 // pred_check_branch
          %723 = sbr.rel (%p721) target = $region76
        $region75: #{tpu_custom_call.1} parent=47 // pred_region
          %s724 = smul.u32 4, %s31
          %726 = vsyncadd %s700, 0
          %s727 = smul.addr %s724, 8
          %s728 = scalar_lea.hbm %s8, %s727
          %s729 = sshll.u32 %s703, 4
          %s730 = int_to_ptr.vmem [resolvable:$true] %s729
          %s731 = sshll.u32 %s728, 4
          %s732 = int_to_ptr.hbm [resolvable:$true] %s731
          %737 = dma.vmem_to_hbm [thread:$0]  %s730, 512, %s732, %s700, 128, 128, 8
        $region76: #{tpu_custom_call.1} parent=47 // pred_fallthru
          _
      $region48: #{tpu_custom_call.1} parent=5 // pred_fallthru
        _
      %p738 = scmp.le.s32.totalorder 2, %s26
      // Predicated region
      $region77: #{tpu_custom_call.1} parent=5 // pred_check
        %p739 = pneg %p738
      $region78: #{tpu_custom_call.1} parent=5 // pred_check_branch
        %741 = sbr.rel (%p739) target = $region80
      $region79: #{tpu_custom_call.1} parent=5 // pred_region
        %s742 = ssub.s32 %s26, 2
        // Predicated region
        $region81: #{tpu_custom_call.1} parent=79 // pred_check
          %p743 = pneg %p207
        $region82: #{tpu_custom_call.1} parent=79 // pred_check_branch
          %745 = sbr.rel (%p743) target = $region84
        $region83: #{tpu_custom_call.1} parent=79 // pred_region
          %s746 = sand.u32 %s192, 1
          %s747 = scalar_lea.sflag [#allocation4], %s746
          %s748 = sand.u32 %s192, 1
          %s749 = smul.addr %s748, 32
          %s750 = scalar_lea.vmem [#allocation11], %s749
          %752 = dma.done %s747, 512
        $region84: #{tpu_custom_call.1} parent=79 // pred_fallthru
          _
        // Predicated region
        $region85: #{tpu_custom_call.1} parent=79 // pred_check
          %p753 = pneg %p233
        $region86: #{tpu_custom_call.1} parent=79 // pred_check_branch
          %755 = sbr.rel (%p753) target = $region88
        $region87: #{tpu_custom_call.1} parent=79 // pred_region
          %s756 = sand.u32 %s218, 1
          %s757 = scalar_lea.sflag [#allocation13], %s756
          %s758 = sand.u32 %s218, 1
          %s759 = smul.addr %s758, 32
          %s760 = scalar_lea.vmem [#allocation12], %s759
          %762 = dma.done %s757, 512
        $region88: #{tpu_custom_call.1} parent=79 // pred_fallthru
          _
      $region80: #{tpu_custom_call.1} parent=5 // pred_fallthru
        _
    $region6: #{tpu_custom_call.1} parent=1 // loop_footer
      %s30 = sadd.s32 1, %s26
    $region7: #{tpu_custom_call.1} parent=1 // loop_footer_branch
      %25 = sbr.rel target = $region3
    $region8: #{tpu_custom_call.1} parent=1 // loop_exit
      _
    %763 = vsyncpa [#allocation3], 1
    %s764 = scalar_lea.sflag [#allocation3], 1
    %765 = vsyncpa %s764, 1
    %766 = vsyncpa [#allocation6], 1
    %767 = vsyncpa [#allocation9], 1
    %768 = vsyncpa [#allocation4], 1
    %s769 = scalar_lea.sflag [#allocation4], 1
    %770 = vsyncpa %s769, 1
    %771 = vsyncpa [#allocation13], 1
    %s772 = scalar_lea.sflag [#allocation13], 1
    %773 = vsyncpa %s772, 1

// kernel: tpu_custom_call.1
$region0: #{tpu_custom_call.1}
  #allocation0 [shape = 'u32[]', space=smem, size = 0x4, offset = 0x4, fixed_abs, tag = 'smem constant byte address 0x4 - core index']
  #allocation1 [shape = 'u32[72,128]{1,0:T(1,128)}', space=vmem, size = 0x9000, scoped, tag = 'internal scratch']
  %s0 = inlined_call_operand.hbm [shape: f32[64,128], index: 0, kind: input, shape index: {}]
  %s1 = inlined_call_operand.hbm [shape: f32[128,128], index: 1, kind: input, shape index: {}]
  %s2 = inlined_call_operand.hbm [shape: f32[128,128], index: 2, kind: input, shape index: {}]
  %s3 = inlined_call_operand.hbm [shape: f32[128,128], index: 3, kind: input, shape index: {}]
  %s4 = inlined_call_operand.vmem [shape: f32[1,128], index: 4, kind: input, shape index: {}]
  %s5 = inlined_call_operand.hbm [shape: f32[128,128], index: 5, kind: input, shape index: {}]
  %s6 = inlined_call_operand.vmem [shape: f32[1,128], index: 6, kind: input, shape index: {}]
  %s7 = inlined_call_operand.hbm [shape: f32[64,128], index: 7, kind: output, shape index: {0}]
  %s8 = inlined_call_operand.hbm [shape: f32[64,128], index: 8, kind: output, shape index: {1}]
  %9 = xla_tuple %s7, %s8
  %s10 = sld [smem:[#allocation0]]
  $region89: #{tpu_custom_call.1} parent=0
    _
  %s12 = ssub.s32 1, %s10
  %s13 = scalar_select 0, %s12, %s10
  $region1: #{tpu_custom_call.1} parent=0
    #allocation2 [shape = 'u8[32768]{0}', space=vmem, size = 0x8000, scoped, tag = 'input window, operand 0']
    #allocation3 [shape = 's32[2]{0}', space=sflag, size = 0x8, scoped, tag = 'scoped memory for tpu_custom_call.1']
    #allocation4 [shape = 's32[2]{0}', space=sflag, size = 0x8, scoped, tag = 'scoped memory for tpu_custom_call.1']
    #allocation5 [shape = 'u8[65536]{0}', space=vmem, size = 0x10000, scoped, tag = 'input window, operand 1, single buffered']
    #allocation6 [shape = 's32[1]{0}', space=sflag, size = 0x4, scoped, tag = 'scoped memory for tpu_custom_call.1']
    #allocation7 [shape = 'u8[65536]{0}', space=vmem, size = 0x10000, scoped, tag = 'input window, operand 2, single buffered']
    #allocation8 [shape = 'u8[65536]{0}', space=vmem, size = 0x10000, scoped, tag = 'input window, operand 3, single buffered']
    #allocation9 [shape = 's32[1]{0}', space=sflag, size = 0x4, scoped, tag = 'scoped memory for tpu_custom_call.1']
    #allocation10 [shape = 'u8[65536]{0}', space=vmem, size = 0x10000, scoped, tag = 'input window, operand 5, single buffered']
    #allocation11 [shape = 'u8[32768]{0}', space=vmem, size = 0x8000, scoped, tag = 'output window, operand 0']
    #allocation12 [shape = 'u8[32768]{0}', space=vmem, size = 0x8000, scoped, tag = 'output window, operand 1']
    #allocation13 [shape = 's32[2]{0}', space=sflag, size = 0x8, scoped, tag = 'scoped memory for tpu_custom_call.1']
    %14 = vsyncpa [#allocation3], 0
    %s15 = scalar_lea.sflag [#allocation3], 1
    %16 = vsyncpa %s15, 0
    %17 = vsyncpa [#allocation6], 0
    %18 = vsyncpa [#allocation9], 0
    %19 = vsyncpa [#allocation4], 0
    %s20 = scalar_lea.sflag [#allocation4], 1
    %21 = vsyncpa %s20, 0
    %22 = vsyncpa [#allocation13], 0
    %s23 = scalar_lea.sflag [#allocation13], 1
    %24 = vsyncpa %s23, 0
    loop: start=0, step=1, limit=4
    $region2: #{tpu_custom_call.1} parent=1 // loop_pre_header
      _
    $region3: #{tpu_custom_call.1} parent=1 // loop_header
      %s26 = sphi 0, %s30
      %p27 = scmp.ge.s32.totalorder %s26, 4
      %s36 = sphi 0, %s38
      %s39 = sphi 0, %s36
      %s40 = sphi 0, %s39
      %s56 = sphi 0, %s40
      %s60 = sphi 0, %s60
      %s62 = sphi 0, %s60
      %s63 = sphi 0, %s62
      %s77 = sphi 0, %s63
      %s81 = sphi 0, %s81
      %s83 = sphi 0, %s81
      %s84 = sphi 0, %s83
      %s98 = sphi 0, %s84
      %s102 = sphi 0, %s102
      %s104 = sphi 0, %s102
      %s105 = sphi 0, %s104
      %s119 = sphi 0, %s105
      %s123 = sphi 0, %s123
      %s125 = sphi 0, %s123
      %s126 = sphi 0, %s125
      %s140 = sphi 0, %s126
      %s144 = sphi 0, %s144
      %s146 = sphi 0, %s144
      %s147 = sphi 0, %s146
      %s161 = sphi 0, %s147
      %s165 = sphi 0, %s165
      %s167 = sphi 0, %s165
      %s168 = sphi 0, %s167
      %s182 = sphi 0, %s168
      %s188 = sphi 0, %s190
      %s191 = sphi 0, %s188
      %s192 = sphi 0, %s191
      %s208 = sphi 0, %s192
      %s214 = sphi 0, %s216
      %s217 = sphi 0, %s214
      %s218 = sphi 0, %s217
      %s234 = sphi 0, %s218
    $region4: #{tpu_custom_call.1} parent=1 // loop_header_branch
      %29 = sbr.rel (%p27) target = $region8
    $region5: #{tpu_custom_call.1} parent=1 // loop_body
      %s31 = ssub.s32 %s26, 1
      %s32 = ssub.s32 %s26, 2
      %s33 = sadd.s32 %s26, 1
      %s34 = ssub.s32 %s26, %s33
      %p35 = scmp.eq.s32.totalorder %s34, 0
      %s37 = sadd.s32 %s36, 1
      %s38 = scalar_select %p35, %s36, %s37
      %p41 = pneg %p35
      %p42 = scmp.eq.s32.totalorder %s26, 1
      %p43 = por %p41, %p42
      %p44 = scmp.ne.s32.totalorder %s36, %s39
      %p45 = scmp.eq.s32.totalorder %s26, 0
      %p46 = por %p44, %p45
      %p47 = scmp.ne.s32.totalorder %s36, %s39
      %p48 = scmp.eq.s32.totalorder %s31, 1
      %p49 = por %p47, %p48
      %p50 = scmp.ne.s32.totalorder %s39, %s40
      %p51 = scmp.eq.s32.totalorder %s31, 0
      %p52 = por %p50, %p51
      %p53 = scmp.ne.s32.totalorder %s39, %s40
      %p54 = scmp.eq.s32.totalorder %s32, 1
      %p55 = por %p53, %p54
      %p57 = scmp.ne.s32.totalorder %s40, %s56
      %p58 = scmp.eq.s32.totalorder %s32, 0
      %p59 = por %p57, %p58
      %s61 = sadd.s32 %s60, 1
      %p64 = scmp.eq.s32.totalorder %s26, 1
      %p65 = scmp.ne.s32.totalorder %s60, %s62
      %p66 = scmp.eq.s32.totalorder %s26, 0
      %p67 = por %p65, %p66
      %p68 = scmp.ne.s32.totalorder %s60, %s62
      %p69 = scmp.eq.s32.totalorder %s31, 1
      %p70 = por %p68, %p69
      %p71 = scmp.ne.s32.totalorder %s62, %s63
      %p72 = scmp.eq.s32.totalorder %s31, 0
      %p73 = por %p71, %p72
      %p74 = scmp.ne.s32.totalorder %s62, %s63
      %p75 = scmp.eq.s32.totalorder %s32, 1
      %p76 = por %p74, %p75
      %p78 = scmp.ne.s32.totalorder %s63, %s77
      %p79 = scmp.eq.s32.totalorder %s32, 0
      %p80 = por %p78, %p79
      %s82 = sadd.s32 %s81, 1
      %p85 = scmp.eq.s32.totalorder %s26, 1
      %p86 = scmp.ne.s32.totalorder %s81, %s83
      %p87 = scmp.eq.s32.totalorder %s26, 0
      %p88 = por %p86, %p87
      %p89 = scmp.ne.s32.totalorder %s81, %s83
      %p90 = scmp.eq.s32.totalorder %s31, 1
      %p91 = por %p89, %p90
      %p92 = scmp.ne.s32.totalorder %s83, %s84
      %p93 = scmp.eq.s32.totalorder %s31, 0
      %p94 = por %p92, %p93
      %p95 = scmp.ne.s32.totalorder %s83, %s84
      %p96 = scmp.eq.s32.totalorder %s32, 1
      %p97 = por %p95, %p96
      %p99 = scmp.ne.s32.totalorder %s84, %s98
      %p100 = scmp.eq.s32.totalorder %s32, 0
      %p101 = por %p99, %p100
      %s103 = sadd.s32 %s102, 1
      %p106 = scmp.eq.s32.totalorder %s26, 1
      %p107 = scmp.ne.s32.totalorder %s102, %s104
      %p108 = scmp.eq.s32.totalorder %s26, 0
      %p109 = por %p107, %p108
      %p110 = scmp.ne.s32.totalorder %s102, %s104
      %p111 = scmp.eq.s32.totalorder %s31, 1
      %p112 = por %p110, %p111
      %p113 = scmp.ne.s32.totalorder %s104, %s105
      %p114 = scmp.eq.s32.totalorder %s31, 0
      %p115 = por %p113, %p114
      %p116 = scmp.ne.s32.totalorder %s104, %s105
      %p117 = scmp.eq.s32.totalorder %s32, 1
      %p118 = por %p116, %p117
      %p120 = scmp.ne.s32.totalorder %s105, %s119
      %p121 = scmp.eq.s32.totalorder %s32, 0
      %p122 = por %p120, %p121
      %s124 = sadd.s32 %s123, 1
      %p127 = scmp.eq.s32.totalorder %s26, 1
      %p128 = scmp.ne.s32.totalorder %s123, %s125
      %p129 = scmp.eq.s32.totalorder %s26, 0
      %p130 = por %p128, %p129
      %p131 = scmp.ne.s32.totalorder %s123, %s125
      %p132 = scmp.eq.s32.totalorder %s31, 1
      %p133 = por %p131, %p132
      %p134 = scmp.ne.s32.totalorder %s125, %s126
      %p135 = scmp.eq.s32.totalorder %s31, 0
      %p136 = por %p134, %p135
      %p137 = scmp.ne.s32.totalorder %s125, %s126
      %p138 = scmp.eq.s32.totalorder %s32, 1
      %p139 = por %p137, %p138
      %p141 = scmp.ne.s32.totalorder %s126, %s140
      %p142 = scmp.eq.s32.totalorder %s32, 0
      %p143 = por %p141, %p142
      %s145 = sadd.s32 %s144, 1
      %p148 = scmp.eq.s32.totalorder %s26, 1
      %p149 = scmp.ne.s32.totalorder %s144, %s146
      %p150 = scmp.eq.s32.totalorder %s26, 0
      %p151 = por %p149, %p150
      %p152 = scmp.ne.s32.totalorder %s144, %s146
      %p153 = scmp.eq.s32.totalorder %s31, 1
      %p154 = por %p152, %p153
      %p155 = scmp.ne.s32.totalorder %s146, %s147
      %p156 = scmp.eq.s32.totalorder %s31, 0
      %p157 = por %p155, %p156
      %p158 = scmp.ne.s32.totalorder %s146, %s147
      %p159 = scmp.eq.s32.totalorder %s32, 1
      %p160 = por %p158, %p159
      %p162 = scmp.ne.s32.totalorder %s147, %s161
      %p163 = scmp.eq.s32.totalorder %s32, 0
      %p164 = por %p162, %p163
      %s166 = sadd.s32 %s165, 1
      %p169 = scmp.eq.s32.totalorder %s26, 1
      %p170 = scmp.ne.s32.totalorder %s165, %s167
      %p171 = scmp.eq.s32.totalorder %s26, 0
      %p172 = por %p170, %p171
      %p173 = scmp.ne.s32.totalorder %s165, %s167
      %p174 = scmp.eq.s32.totalorder %s31, 1
      %p175 = por %p173, %p174
      %p176 = scmp.ne.s32.totalorder %s167, %s168
      %p177 = scmp.eq.s32.totalorder %s31, 0
      %p178 = por %p176, %p177
      %p179 = scmp.ne.s32.totalorder %s167, %s168
      %p180 = scmp.eq.s32.totalorder %s32, 1
      %p181 = por %p179, %p180
      %p183 = scmp.ne.s32.totalorder %s168, %s182
      %p184 = scmp.eq.s32.totalorder %s32, 0
      %p185 = por %p183, %p184
      %s186 = ssub.s32 %s26, %s33
      %p187 = scmp.eq.s32.totalorder %s186, 0
      %s189 = sadd.s32 %s188, 1
      %s190 = scalar_select %p187, %s188, %s189
      %p193 = pneg %p187
      %p194 = scmp.eq.s32.totalorder %s26, 1
      %p195 = por %p193, %p194
      %p196 = scmp.ne.s32.totalorder %s188, %s191
      %p197 = scmp.eq.s32.totalorder %s26, 0
      %p198 = por %p196, %p197
      %p199 = scmp.ne.s32.totalorder %s188, %s191
      %p200 = scmp.eq.s32.totalorder %s31, 1
      %p201 = por %p199, %p200
      %p202 = scmp.ne.s32.totalorder %s191, %s192
      %p203 = scmp.eq.s32.totalorder %s31, 0
      %p204 = por %p202, %p203
      %p205 = scmp.ne.s32.totalorder %s191, %s192
      %p206 = scmp.eq.s32.totalorder %s32, 1
      %p207 = por %p205, %p206
      %p209 = scmp.ne.s32.totalorder %s192, %s208
      %p210 = scmp.eq.s32.totalorder %s32, 0
      %p211 = por %p209, %p210
      %s212 = ssub.s32 %s26, %s33
      %p213 = scmp.eq.s32.totalorder %s212, 0
      %s215 = sadd.s32 %s214, 1
      %s216 = scalar_select %p213, %s214, %s215
      %p219 = pneg %p213
      %p220 = scmp.eq.s32.totalorder %s26, 1
      %p221 = por %p219, %p220
      %p222 = scmp.ne.s32.totalorder %s214, %s217
      %p223 = scmp.eq.s32.totalorder %s26, 0
      %p224 = por %p222, %p223
      %p225 = scmp.ne.s32.totalorder %s214, %s217
      %p226 = scmp.eq.s32.totalorder %s31, 1
      %p227 = por %p225, %p226
      %p228 = scmp.ne.s32.totalorder %s217, %s218
      %p229 = scmp.eq.s32.totalorder %s31, 0
      %p230 = por %p228, %p229
      %p231 = scmp.ne.s32.totalorder %s217, %s218
      %p232 = scmp.eq.s32.totalorder %s32, 1
      %p233 = por %p231, %p232
      %p235 = scmp.ne.s32.totalorder %s218, %s234
      %p236 = scmp.eq.s32.totalorder %s32, 0
      %p237 = por %p235, %p236
      %p238 = scmp.le.s32.totalorder 1, %s26
      %p239 = scmp.lt.s32.totalorder %s26, 3
      %p240 = pnand %p238, %p239
      %p241 = pneg %p240
      // Predicated region
      $region9: #{tpu_custom_call.1} parent=5 // pred_check
        _
      $region10: #{tpu_custom_call.1} parent=5 // pred_check_branch
        %243 = sbr.rel (%p240) target = $region12
      $region11: #{tpu_custom_call.1} parent=5 // pred_region
        %s244 = ssub.s32 %s26, 1
        // Predicated region
        $region13: #{tpu_custom_call.1} parent=11 // pred_check
          %p245 = pneg %p73
        $region14: #{tpu_custom_call.1} parent=11 // pred_check_branch
          %247 = sbr.rel (%p245) target = $region16
        $region15: #{tpu_custom_call.1} parent=11 // pred_region
          %249 = vsyncadd [#allocation6], 0
          %s250 = sshll.u32 %s1, 4
          %s251 = int_to_ptr.hbm [resolvable:$true] %s250
          %s252 = sshll.u32 [#allocation5], 4
          %s253 = int_to_ptr.vmem [resolvable:$true] %s252
          %258 = dma.hbm_to_vmem [thread:$0]  %s251, 2048, %s253, [#allocation6], 128, 128, 8
        $region16: #{tpu_custom_call.1} parent=11 // pred_fallthru
          _
        // Predicated region
        $region17: #{tpu_custom_call.1} parent=11 // pred_check
          %p259 = pneg %p94
        $region18: #{tpu_custom_call.1} parent=11 // pred_check_branch
          %261 = sbr.rel (%p259) target = $region20
        $region19: #{tpu_custom_call.1} parent=11 // pred_region
          %263 = vsyncadd [#allocation6], 0
          %s264 = sshll.u32 %s2, 4
          %s265 = int_to_ptr.hbm [resolvable:$true] %s264
          %s266 = sshll.u32 [#allocation7], 4
          %s267 = int_to_ptr.vmem [resolvable:$true] %s266
          %272 = dma.hbm_to_vmem [thread:$0]  %s265, 2048, %s267, [#allocation6], 128, 128, 8
        $region20: #{tpu_custom_call.1} parent=11 // pred_fallthru
          _
        // Predicated region
        $region21: #{tpu_custom_call.1} parent=11 // pred_check
          %p273 = pneg %p115
        $region22: #{tpu_custom_call.1} parent=11 // pred_check_branch
          %275 = sbr.rel (%p273) target = $region24
        $region23: #{tpu_custom_call.1} parent=11 // pred_region
          %277 = vsyncadd [#allocation9], 0
          %s278 = sshll.u32 %s3, 4
          %s279 = int_to_ptr.hbm [resolvable:$true] %s278
          %s280 = sshll.u32 [#allocation8], 4
          %s281 = int_to_ptr.vmem [resolvable:$true] %s280
          %286 = dma.hbm_to_vmem [thread:$0]  %s279, 2048, %s281, [#allocation9], 128, 128, 8
        $region24: #{tpu_custom_call.1} parent=11 // pred_fallthru
          _
        // Predicated region
        $region25: #{tpu_custom_call.1} parent=11 // pred_check
          %p287 = pneg %p136
        $region26: #{tpu_custom_call.1} parent=11 // pred_check_branch
          %289 = sbr.rel (%p287) target = $region28
        $region27: #{tpu_custom_call.1} parent=11 // pred_region
          _
        $region28: #{tpu_custom_call.1} parent=11 // pred_fallthru
          _
        // Predicated region
        $region29: #{tpu_custom_call.1} parent=11 // pred_check
          %p290 = pneg %p157
        $region30: #{tpu_custom_call.1} parent=11 // pred_check_branch
          %292 = sbr.rel (%p290) target = $region32
        $region31: #{tpu_custom_call.1} parent=11 // pred_region
          %294 = vsyncadd [#allocation9], 0
          %s295 = sshll.u32 %s5, 4
          %s296 = int_to_ptr.hbm [resolvable:$true] %s295
          %s297 = sshll.u32 [#allocation10], 4
          %s298 = int_to_ptr.vmem [resolvable:$true] %s297
          %303 = dma.hbm_to_vmem [thread:$0]  %s296, 2048, %s298, [#allocation9], 128, 128, 8
        $region32: #{tpu_custom_call.1} parent=11 // pred_fallthru
          _
        // Predicated region
        $region33: #{tpu_custom_call.1} parent=11 // pred_check
          %p304 = pneg %p178
        $region34: #{tpu_custom_call.1} parent=11 // pred_check_branch
          %306 = sbr.rel (%p304) target = $region36
        $region35: #{tpu_custom_call.1} parent=11 // pred_region
          _
        $region36: #{tpu_custom_call.1} parent=11 // pred_fallthru
          _
      $region12: #{tpu_custom_call.1} parent=5 // pred_fallthru
        _
      %p307 = scmp.lt.s32.totalorder %s26, 2
      // Predicated region
      $region37: #{tpu_custom_call.1} parent=5 // pred_check
        %p308 = pneg %p307
      $region38: #{tpu_custom_call.1} parent=5 // pred_check_branch
        %310 = sbr.rel (%p308) target = $region40
      $region39: #{tpu_custom_call.1} parent=5 // pred_region
        // Predicated region
        $region41: #{tpu_custom_call.1} parent=39 // pred_check
          %p311 = pneg %p46
        $region42: #{tpu_custom_call.1} parent=39 // pred_check_branch
          %313 = sbr.rel (%p311) target = $region44
        $region43: #{tpu_custom_call.1} parent=39 // pred_region
          %s314 = sand.u32 %s36, 1
          %s315 = scalar_lea.sflag [#allocation3], %s314
          %s316 = sand.u32 %s36, 1
          %s317 = smul.addr %s316, 32
          %s318 = scalar_lea.vmem [#allocation2], %s317
          %s319 = smul.u32 4, %s26
          %321 = vsyncadd %s315, 0
          %s322 = smul.addr %s319, 8
          %s323 = scalar_lea.hbm %s0, %s322
          %s324 = sshll.u32 %s323, 4
          %s325 = int_to_ptr.hbm [resolvable:$true] %s324
          %s326 = sshll.u32 %s318, 4
          %s327 = int_to_ptr.vmem [resolvable:$true] %s326
          %332 = dma.hbm_to_vmem [thread:$0]  %s325, 512, %s327, %s315, 128, 128, 8
        $region44: #{tpu_custom_call.1} parent=39 // pred_fallthru
          _
      $region40: #{tpu_custom_call.1} parent=5 // pred_fallthru
        _
      %p333 = scmp.le.s32.totalorder 1, %s26
      %p334 = scmp.lt.s32.totalorder %s26, 3
      %p335 = pnand %p333, %p334
      %p336 = pneg %p335
      // Predicated region
      $region45: #{tpu_custom_call.1} parent=5 // pred_check
        _
      $region46: #{tpu_custom_call.1} parent=5 // pred_check_branch
        %338 = sbr.rel (%p335) target = $region48
      $region47: #{tpu_custom_call.1} parent=5 // pred_region
        %s339 = ssub.s32 %s26, 1
        %s340 = sand.u32 %s39, 1
        %s341 = scalar_lea.sflag [#allocation3], %s340
        %s342 = sand.u32 %s39, 1
        %s343 = smul.addr %s342, 32
        %s344 = scalar_lea.vmem [#allocation2], %s343
        // Predicated region
        $region49: #{tpu_custom_call.1} parent=47 // pred_check
          %p345 = pneg %p52
        $region50: #{tpu_custom_call.1} parent=47 // pred_check_branch
          %347 = sbr.rel (%p345) target = $region52
        $region51: #{tpu_custom_call.1} parent=47 // pred_region
          %349 = dma.done %s341, 512
        $region52: #{tpu_custom_call.1} parent=47 // pred_fallthru
          _
        // Predicated region
        $region53: #{tpu_custom_call.1} parent=47 // pred_check
          %p350 = pneg %p73
        $region54: #{tpu_custom_call.1} parent=47 // pred_check_branch
          %352 = sbr.rel (%p350) target = $region56
        $region55: #{tpu_custom_call.1} parent=47 // pred_region
          %354 = dma.done [#allocation6], 2048
        $region56: #{tpu_custom_call.1} parent=47 // pred_fallthru
          _
        // Predicated region
        $region57: #{tpu_custom_call.1} parent=47 // pred_check
          %p355 = pneg %p94
        $region58: #{tpu_custom_call.1} parent=47 // pred_check_branch
          %357 = sbr.rel (%p355) target = $region60
        $region59: #{tpu_custom_call.1} parent=47 // pred_region
          %359 = dma.done [#allocation6], 2048
        $region60: #{tpu_custom_call.1} parent=47 // pred_fallthru
          _
        // Predicated region
        $region61: #{tpu_custom_call.1} parent=47 // pred_check
          %p360 = pneg %p115
        $region62: #{tpu_custom_call.1} parent=47 // pred_check_branch
          %362 = sbr.rel (%p360) target = $region64
        $region63: #{tpu_custom_call.1} parent=47 // pred_region
          %364 = dma.done [#allocation9], 2048
        $region64: #{tpu_custom_call.1} parent=47 // pred_fallthru
          _
        // Predicated region
        $region65: #{tpu_custom_call.1} parent=47 // pred_check
          %p365 = pneg %p157
        $region66: #{tpu_custom_call.1} parent=47 // pred_check_branch
          %367 = sbr.rel (%p365) target = $region68
        $region67: #{tpu_custom_call.1} parent=47 // pred_region
          %369 = dma.done [#allocation9], 2048
        $region68: #{tpu_custom_call.1} parent=47 // pred_fallthru
          _
        %s370 = sand.u32 %s39, 1
        %s371 = scalar_lea.sflag [#allocation3], %s370
        %s372 = sand.u32 %s39, 1
        %s373 = smul.addr %s372, 32
        %s374 = scalar_lea.vmem [#allocation2], %s373
        %p375 = pneg %p52
        %p376 = pneg %p49
        %p377 = pneg %p73
        %p378 = pneg %p70
        %p379 = pneg %p94
        %p380 = pneg %p91
        %p381 = pneg %p115
        %p382 = pneg %p112
        %p383 = pneg %p136
        %p384 = pneg %p133
        %p385 = pneg %p157
        %p386 = pneg %p154
        %p387 = pneg %p178
        %p388 = pneg %p175
        %p389 = pneg %p204
        %p390 = pneg %p201
        %s391 = sand.u32 %s191, 1
        %s392 = scalar_lea.sflag [#allocation4], %s391
        %s393 = sand.u32 %s191, 1
        %s394 = smul.addr %s393, 32
        %s395 = scalar_lea.vmem [#allocation11], %s394
        %p396 = pneg %p230
        %p397 = pneg %p227
        %s398 = sand.u32 %s217, 1
        %s399 = scalar_lea.sflag [#allocation13], %s398
        %s400 = sand.u32 %s217, 1
        %s401 = smul.addr %s400, 32
        %s402 = scalar_lea.vmem [#allocation12], %s401
        %s403 = smul.u32 4, %s31
        %s404 = smul.u32 4, %s31
        %s405 = smul.u32 4, %s31
        %v406 = vld [vmem:[%s344] sm:$0xff]
        %v407 = vld [vmem:[%s344 + $0x8] sm:$0xff]
        %v408 = vld [vmem:[%s344 + $0x10] sm:$0xff]
        %v409 = vld [vmem:[%s344 + $0x18] sm:$0xff]
        %v410 = vld [vmem:[#allocation5] sm:$0xff]
        %v411 = vld [vmem:[#allocation5 + $0x8] sm:$0xff]
        %v412 = vld [vmem:[#allocation5 + $0x10] sm:$0xff]
        %v413 = vld [vmem:[#allocation5 + $0x18] sm:$0xff]
        %v414 = vld [vmem:[#allocation5 + $0x20] sm:$0xff]
        %v415 = vld [vmem:[#allocation5 + $0x28] sm:$0xff]
        %v416 = vld [vmem:[#allocation5 + $0x30] sm:$0xff]
        %v417 = vld [vmem:[#allocation5 + $0x38] sm:$0xff]
        %v418 = vld [vmem:[#allocation5 + $0x40] sm:$0xff]
        %v419 = vld [vmem:[#allocation5 + $0x48] sm:$0xff]
        %v420 = vld [vmem:[#allocation5 + $0x50] sm:$0xff]
        %v421 = vld [vmem:[#allocation5 + $0x58] sm:$0xff]
        %v422 = vld [vmem:[#allocation5 + $0x60] sm:$0xff]
        %v423 = vld [vmem:[#allocation5 + $0x68] sm:$0xff]
        %v424 = vld [vmem:[#allocation5 + $0x70] sm:$0xff]
        %v425 = vld [vmem:[#allocation5 + $0x78] sm:$0xff]
        %426 = vmatpush.msra.mxu0 %v425
        %427 = vmatpush.msra.mxu0 %v424
        %428 = vmatpush.msra.mxu0 %v423
        %429 = vmatpush.msra.mxu0 %v422
        %430 = vmatpush.msra.mxu0 %v421
        %431 = vmatpush.msra.mxu0 %v420
        %432 = vmatpush.msra.mxu0 %v419
        %433 = vmatpush.msra.mxu0 %v418
        %434 = vmatpush.msra.mxu0 %v417
        %435 = vmatpush.msra.mxu0 %v416
        %436 = vmatpush.msra.mxu0 %v415
        %437 = vmatpush.msra.mxu0 %v414
        %438 = vmatpush.msra.mxu0 %v413
        %439 = vmatpush.msra.mxu0 %v412
        %440 = vmatpush.msra.mxu0 %v411
        %441 = vmatpush.msra.mxu0 %v410
        %442 = vmatmul.f32.gmra.mxu0 %v406
        %v443 = vpop.f32.mrf.mxu0
        %v444 = vadd.f32 0.0, %v443
        %445 = vmatmul.f32.gmra.mxu0 %v407
        %v446 = vpop.f32.mrf.mxu0
        %v447 = vadd.f32 0.0, %v446
        %448 = vmatmul.f32.gmra.mxu0 %v408
        %v449 = vpop.f32.mrf.mxu0
        %v450 = vadd.f32 0.0, %v449
        %451 = vmatmul.f32.gmra.mxu0 %v409
        %v452 = vpop.f32.mrf.mxu0
        %v453 = vadd.f32 0.0, %v452
        %454 = vdwg.mxu0
        %v455 = vmax.f32 %v444, 0.0
        %v456 = vmax.f32 %v447, 0.0
        %v457 = vmax.f32 %v450, 0.0
        %v458 = vmax.f32 %v453, 0.0
        %v459 = vld [vmem:[#allocation7] sm:$0xff]
        %v460 = vld [vmem:[#allocation7 + $0x8] sm:$0xff]
        %v461 = vld [vmem:[#allocation7 + $0x10] sm:$0xff]
        %v462 = vld [vmem:[#allocation7 + $0x18] sm:$0xff]
        %v463 = vld [vmem:[#allocation7 + $0x20] sm:$0xff]
        %v464 = vld [vmem:[#allocation7 + $0x28] sm:$0xff]
        %v465 = vld [vmem:[#allocation7 + $0x30] sm:$0xff]
        %v466 = vld [vmem:[#allocation7 + $0x38] sm:$0xff]
        %v467 = vld [vmem:[#allocation7 + $0x40] sm:$0xff]
        %v468 = vld [vmem:[#allocation7 + $0x48] sm:$0xff]
        %v469 = vld [vmem:[#allocation7 + $0x50] sm:$0xff]
        %v470 = vld [vmem:[#allocation7 + $0x58] sm:$0xff]
        %v471 = vld [vmem:[#allocation7 + $0x60] sm:$0xff]
        %v472 = vld [vmem:[#allocation7 + $0x68] sm:$0xff]
        %v473 = vld [vmem:[#allocation7 + $0x70] sm:$0xff]
        %v474 = vld [vmem:[#allocation7 + $0x78] sm:$0xff]
        %475 = vmatpush.msra.mxu0 %v474
        %476 = vmatpush.msra.mxu0 %v473
        %477 = vmatpush.msra.mxu0 %v472
        %478 = vmatpush.msra.mxu0 %v471
        %479 = vmatpush.msra.mxu0 %v470
        %480 = vmatpush.msra.mxu0 %v469
        %481 = vmatpush.msra.mxu0 %v468
        %482 = vmatpush.msra.mxu0 %v467
        %483 = vmatpush.msra.mxu0 %v466
        %484 = vmatpush.msra.mxu0 %v465
        %485 = vmatpush.msra.mxu0 %v464
        %486 = vmatpush.msra.mxu0 %v463
        %487 = vmatpush.msra.mxu0 %v462
        %488 = vmatpush.msra.mxu0 %v461
        %489 = vmatpush.msra.mxu0 %v460
        %490 = vmatpush.msra.mxu0 %v459
        %491 = vmatmul.f32.gmra.mxu0 %v455
        %v492 = vpop.f32.mrf.mxu0
        %v493 = vadd.f32 0.0, %v492
        %494 = vmatmul.f32.gmra.mxu0 %v456
        %v495 = vpop.f32.mrf.mxu0
        %v496 = vadd.f32 0.0, %v495
        %497 = vmatmul.f32.gmra.mxu0 %v457
        %v498 = vpop.f32.mrf.mxu0
        %v499 = vadd.f32 0.0, %v498
        %500 = vmatmul.f32.gmra.mxu0 %v458
        %v501 = vpop.f32.mrf.mxu0
        %v502 = vadd.f32 0.0, %v501
        %503 = vdwg.mxu0
        %v504 = vsub.f32 0.0, %v493
        %v505 = vsub.f32 0.0, %v496
        %v506 = vsub.f32 0.0, %v499
        %v507 = vsub.f32 0.0, %v502
        %v508 = vmul.f32 %v504, 1.442695
        %v509 = vpow.pop %v508
        %v510 = vmul.f32 %v505, 1.442695
        %v511 = vpow.pop %v510
        %v512 = vmul.f32 %v506, 1.442695
        %v513 = vpow.pop %v512
        %v514 = vmul.f32 %v507, 1.442695
        %v515 = vpow.pop %v514
        %v516 = vadd.f32 %v509, 1.0
        %v517 = vadd.f32 %v511, 1.0
        %v518 = vadd.f32 %v513, 1.0
        %v519 = vadd.f32 %v515, 1.0
        %v520 = vrcp.pop %v516
        %v521 = vmul.f32 %v516, %v520
        %v522 = vsub.f32 1.0, %v521
        %v523 = vmul.f32 %v520, %v522
        %v524 = vadd.f32 %v520, %v523
        %vm525 = vweird.f32 %v516
        %vm526 = vweird.f32 %v520
        %vm527 = vmor %vm525, %vm526
        %v528 = vsel %vm527, %v520, %v524
        %v529 = vand.u32 2147483647, %v516
        %vm530 = vcmp.eq.f32.partialorder %v529, 8.507059e+37
        %v531 = vand.u32 %v516, 2147483648
        %v532 = vor.u32 1.1754944e-38, %v531
        %v533 = vsel %vm530, %v532, %v528
        %v534 = vmul.f32 1.0, %v533
        %v535 = vrcp.pop %v517
        %v536 = vmul.f32 %v517, %v535
        %v537 = vsub.f32 1.0, %v536
        %v538 = vmul.f32 %v535, %v537
        %v539 = vadd.f32 %v535, %v538
        %vm540 = vweird.f32 %v517
        %vm541 = vweird.f32 %v535
        %vm542 = vmor %vm540, %vm541
        %v543 = vsel %vm542, %v535, %v539
        %v544 = vand.u32 2147483647, %v517
        %vm545 = vcmp.eq.f32.partialorder %v544, 8.507059e+37
        %v546 = vand.u32 %v517, 2147483648
        %v547 = vor.u32 1.1754944e-38, %v546
        %v548 = vsel %vm545, %v547, %v543
        %v549 = vmul.f32 1.0, %v548
        %v550 = vrcp.pop %v518
        %v551 = vmul.f32 %v518, %v550
        %v552 = vsub.f32 1.0, %v551
        %v553 = vmul.f32 %v550, %v552
        %v554 = vadd.f32 %v550, %v553
        %vm555 = vweird.f32 %v518
        %vm556 = vweird.f32 %v550
        %vm557 = vmor %vm555, %vm556
        %v558 = vsel %vm557, %v550, %v554
        %v559 = vand.u32 2147483647, %v518
        %vm560 = vcmp.eq.f32.partialorder %v559, 8.507059e+37
        %v561 = vand.u32 %v518, 2147483648
        %v562 = vor.u32 1.1754944e-38, %v561
        %v563 = vsel %vm560, %v562, %v558
        %v564 = vmul.f32 1.0, %v563
        %v565 = vrcp.pop %v519
        %v566 = vmul.f32 %v519, %v565
        %v567 = vsub.f32 1.0, %v566
        %v568 = vmul.f32 %v565, %v567
        %v569 = vadd.f32 %v565, %v568
        %vm570 = vweird.f32 %v519
        %vm571 = vweird.f32 %v565
        %vm572 = vmor %vm570, %vm571
        %v573 = vsel %vm572, %v565, %v569
        %v574 = vand.u32 2147483647, %v519
        %vm575 = vcmp.eq.f32.partialorder %v574, 8.507059e+37
        %v576 = vand.u32 %v519, 2147483648
        %v577 = vor.u32 1.1754944e-38, %v576
        %v578 = vsel %vm575, %v577, %v573
        %v579 = vmul.f32 1.0, %v578
        %v580 = vmul.f32 %v406, %v534
        %v581 = vmul.f32 %v407, %v549
        %v582 = vmul.f32 %v408, %v564
        %v583 = vmul.f32 %v409, %v579
        %v584 = vld [vmem:[#allocation8] sm:$0xff]
        %v585 = vld [vmem:[#allocation8 + $0x8] sm:$0xff]
        %v586 = vld [vmem:[#allocation8 + $0x10] sm:$0xff]
        %v587 = vld [vmem:[#allocation8 + $0x18] sm:$0xff]
        %v588 = vld [vmem:[#allocation8 + $0x20] sm:$0xff]
        %v589 = vld [vmem:[#allocation8 + $0x28] sm:$0xff]
        %v590 = vld [vmem:[#allocation8 + $0x30] sm:$0xff]
        %v591 = vld [vmem:[#allocation8 + $0x38] sm:$0xff]
        %v592 = vld [vmem:[#allocation8 + $0x40] sm:$0xff]
        %v593 = vld [vmem:[#allocation8 + $0x48] sm:$0xff]
        %v594 = vld [vmem:[#allocation8 + $0x50] sm:$0xff]
        %v595 = vld [vmem:[#allocation8 + $0x58] sm:$0xff]
        %v596 = vld [vmem:[#allocation8 + $0x60] sm:$0xff]
        %v597 = vld [vmem:[#allocation8 + $0x68] sm:$0xff]
        %v598 = vld [vmem:[#allocation8 + $0x70] sm:$0xff]
        %v599 = vld [vmem:[#allocation8 + $0x78] sm:$0xff]
        %v600 = vld [vmem:[%s4] sm:$0x1]
        %v602 = vperm.slane %v600, 0
        %604 = vmatpush.msra.mxu0 %v599
        %605 = vmatpush.msra.mxu0 %v598
        %606 = vmatpush.msra.mxu0 %v597
        %607 = vmatpush.msra.mxu0 %v596
        %608 = vmatpush.msra.mxu0 %v595
        %609 = vmatpush.msra.mxu0 %v594
        %610 = vmatpush.msra.mxu0 %v593
        %611 = vmatpush.msra.mxu0 %v592
        %612 = vmatpush.msra.mxu0 %v591
        %613 = vmatpush.msra.mxu0 %v590
        %614 = vmatpush.msra.mxu0 %v589
        %615 = vmatpush.msra.mxu0 %v588
        %616 = vmatpush.msra.mxu0 %v587
        %617 = vmatpush.msra.mxu0 %v586
        %618 = vmatpush.msra.mxu0 %v585
        %619 = vmatpush.msra.mxu0 %v584
        %620 = vmatmul.f32.gmra.mxu0 %v580
        %v621 = vpop.f32.mrf.mxu0
        %v622 = vadd.f32 %v602, %v621
        %623 = vmatmul.f32.gmra.mxu0 %v581
        %v624 = vpop.f32.mrf.mxu0
        %v625 = vadd.f32 %v602, %v624
        %626 = vmatmul.f32.gmra.mxu0 %v582
        %v627 = vpop.f32.mrf.mxu0
        %v628 = vadd.f32 %v602, %v627
        %629 = vmatmul.f32.gmra.mxu0 %v583
        %v630 = vpop.f32.mrf.mxu0
        %v631 = vadd.f32 %v602, %v630
        %632 = vdwg.mxu0
        %v633 = vmax.f32 %v622, 0.0
        %v634 = vmax.f32 %v625, 0.0
        %v635 = vmax.f32 %v628, 0.0
        %v636 = vmax.f32 %v631, 0.0
        %v637 = vld [vmem:[#allocation10] sm:$0xff]
        %v638 = vld [vmem:[#allocation10 + $0x8] sm:$0xff]
        %v639 = vld [vmem:[#allocation10 + $0x10] sm:$0xff]
        %v640 = vld [vmem:[#allocation10 + $0x18] sm:$0xff]
        %v641 = vld [vmem:[#allocation10 + $0x20] sm:$0xff]
        %v642 = vld [vmem:[#allocation10 + $0x28] sm:$0xff]
        %v643 = vld [vmem:[#allocation10 + $0x30] sm:$0xff]
        %v644 = vld [vmem:[#allocation10 + $0x38] sm:$0xff]
        %v645 = vld [vmem:[#allocation10 + $0x40] sm:$0xff]
        %v646 = vld [vmem:[#allocation10 + $0x48] sm:$0xff]
        %v647 = vld [vmem:[#allocation10 + $0x50] sm:$0xff]
        %v648 = vld [vmem:[#allocation10 + $0x58] sm:$0xff]
        %v649 = vld [vmem:[#allocation10 + $0x60] sm:$0xff]
        %v650 = vld [vmem:[#allocation10 + $0x68] sm:$0xff]
        %v651 = vld [vmem:[#allocation10 + $0x70] sm:$0xff]
        %v652 = vld [vmem:[#allocation10 + $0x78] sm:$0xff]
        %v653 = vld [vmem:[%s6] sm:$0x1]
        %v655 = vperm.slane %v653, 0
        %657 = vmatpush.msra.mxu0 %v652
        %658 = vmatpush.msra.mxu0 %v651
        %659 = vmatpush.msra.mxu0 %v650
        %660 = vmatpush.msra.mxu0 %v649
        %661 = vmatpush.msra.mxu0 %v648
        %662 = vmatpush.msra.mxu0 %v647
        %663 = vmatpush.msra.mxu0 %v646
        %664 = vmatpush.msra.mxu0 %v645
        %665 = vmatpush.msra.mxu0 %v644
        %666 = vmatpush.msra.mxu0 %v643
        %667 = vmatpush.msra.mxu0 %v642
        %668 = vmatpush.msra.mxu0 %v641
        %669 = vmatpush.msra.mxu0 %v640
        %670 = vmatpush.msra.mxu0 %v639
        %671 = vmatpush.msra.mxu0 %v638
        %672 = vmatpush.msra.mxu0 %v637
        %673 = vmatmul.f32.gmra.mxu0 %v633
        %v674 = vpop.f32.mrf.mxu0
        %v675 = vadd.f32 %v655, %v674
        %676 = vmatmul.f32.gmra.mxu0 %v634
        %v677 = vpop.f32.mrf.mxu0
        %v678 = vadd.f32 %v655, %v677
        %679 = vmatmul.f32.gmra.mxu0 %v635
        %v680 = vpop.f32.mrf.mxu0
        %v681 = vadd.f32 %v655, %v680
        %682 = vmatmul.f32.gmra.mxu0 %v636
        %v683 = vpop.f32.mrf.mxu0
        %v684 = vadd.f32 %v655, %v683
        %685 = vdwg.mxu0
        %686 = vst [vmem:[%s395] sm:$0xff] %v675
        %687 = vst [vmem:[%s395 + $0x8] sm:$0xff] %v678
        %688 = vst [vmem:[%s395 + $0x10] sm:$0xff] %v681
        %689 = vst [vmem:[%s395 + $0x18] sm:$0xff] %v684
        %690 = vst [vmem:[%s402] sm:$0xff] %v534
        %691 = vst [vmem:[%s402 + $0x8] sm:$0xff] %v549
        %692 = vst [vmem:[%s402 + $0x10] sm:$0xff] %v564
        %693 = vst [vmem:[%s402 + $0x18] sm:$0xff] %v579
        %s694 = sand.u32 %s191, 1
        %s695 = scalar_lea.sflag [#allocation4], %s694
        %s696 = sand.u32 %s191, 1
        %s697 = smul.addr %s696, 32
        %s698 = scalar_lea.vmem [#allocation11], %s697
        %s699 = sand.u32 %s217, 1
        %s700 = scalar_lea.sflag [#allocation13], %s699
        %s701 = sand.u32 %s217, 1
        %s702 = smul.addr %s701, 32
        %s703 = scalar_lea.vmem [#allocation12], %s702
        // Predicated region
        $region69: #{tpu_custom_call.1} parent=47 // pred_check
          %p704 = pneg %p201
        $region70: #{tpu_custom_call.1} parent=47 // pred_check_branch
          %706 = sbr.rel (%p704) target = $region72
        $region71: #{tpu_custom_call.1} parent=47 // pred_region
          %s707 = smul.u32 4, %s31
          %709 = vsyncadd %s695, 0
          %s710 = smul.addr %s707, 8
          %s711 = scalar_lea.hbm %s7, %s710
          %s712 = sshll.u32 %s698, 4
          %s713 = int_to_ptr.vmem [resolvable:$true] %s712
          %s714 = sshll.u32 %s711, 4
          %s715 = int_to_ptr.hbm [resolvable:$true] %s714
          %720 = dma.vmem_to_hbm [thread:$0]  %s713, 512, %s715, %s695, 128, 128, 8
        $region72: #{tpu_custom_call.1} parent=47 // pred_fallthru
          _
        // Predicated region
        $region73: #{tpu_custom_call.1} parent=47 // pred_check
          %p721 = pneg %p227
        $region74: #{tpu_custom_call.1} parent=47 // pred_check_branch
          %723 = sbr.rel (%p721) target = $region76
        $region75: #{tpu_custom_call.1} parent=47 // pred_region
          %s724 = smul.u32 4, %s31
          %726 = vsyncadd %s700, 0
          %s727 = smul.addr %s724, 8
          %s728 = scalar_lea.hbm %s8, %s727
          %s729 = sshll.u32 %s703, 4
          %s730 = int_to_ptr.vmem [resolvable:$true] %s729
          %s731 = sshll.u32 %s728, 4
          %s732 = int_to_ptr.hbm [resolvable:$true] %s731
          %737 = dma.vmem_to_hbm [thread:$0]  %s730, 512, %s732, %s700, 128, 128, 8
        $region76: #{tpu_custom_call.1} parent=47 // pred_fallthru
          _
      $region48: #{tpu_custom_call.1} parent=5 // pred_fallthru
        _
      %p738 = scmp.le.s32.totalorder 2, %s26
      // Predicated region
      $region77: #{tpu_custom_call.1} parent=5 // pred_check
        %p739 = pneg %p738
      $region78: #{tpu_custom_call.1} parent=5 // pred_check_branch
        %741 = sbr.rel (%p739) target = $region80
      $region79: #{tpu_custom_call.1} parent=5 // pred_region
        %s742 = ssub.s32 %s26, 2
        // Predicated region
        $region81: #{tpu_custom_call.1} parent=79 // pred_check
          %p743 = pneg %p207
        $region82: #{tpu_custom_call.1} parent=79 // pred_check_branch
          %745 = sbr.rel (%p743) target = $region84
        $region83: #{tpu_custom_call.1} parent=79 // pred_region
          %s746 = sand.u32 %s192, 1
          %s747 = scalar_lea.sflag [#allocation4], %s746
          %s748 = sand.u32 %s192, 1
          %s749 = smul.addr %s748, 32
          %s750 = scalar_lea.vmem [#allocation11], %s749
          %752 = dma.done %s747, 512
        $region84: #{tpu_custom_call.1} parent=79 // pred_fallthru
          _
        // Predicated region
        $region85: #{tpu_custom_call.1} parent=79 // pred_check
          %p753 = pneg %p233
        $region86: #{tpu_custom_call.1} parent=79 // pred_check_branch
          %755 = sbr.rel (%p753) target = $region88
        $region87: #{tpu_custom_call.1} parent=79 // pred_region
          %s756 = sand.u32 %s218, 1
          %s757 = scalar_lea.sflag [#allocation13], %s756
          %s758 = sand.u32 %s218, 1
          %s759 = smul.addr %s758, 32
          %s760 = scalar_lea.vmem [#allocation12], %s759
          %762 = dma.done %s757, 512
        $region88: #{tpu_custom_call.1} parent=79 // pred_fallthru
          _
      $region80: #{tpu_custom_call.1} parent=5 // pred_fallthru
        _
    $region6: #{tpu_custom_call.1} parent=1 // loop_footer
      %s30 = sadd.s32 1, %s26
    $region7: #{tpu_custom_call.1} parent=1 // loop_footer_branch
      %25 = sbr.rel target = $region3
    $region8: #{tpu_custom_call.1} parent=1 // loop_exit
      _
    %763 = vsyncpa [#allocation3], 1
    %s764 = scalar_lea.sflag [#allocation3], 1
    %765 = vsyncpa %s764, 1
    %766 = vsyncpa [#allocation6], 1
    %767 = vsyncpa [#allocation9], 1
    %768 = vsyncpa [#allocation4], 1
    %s769 = scalar_lea.sflag [#allocation4], 1
    %770 = vsyncpa %s769, 1
    %771 = vsyncpa [#allocation13], 1
    %s772 = scalar_lea.sflag [#allocation13], 1
    %773 = vsyncpa %s772, 1

</llo_original>
